<compile_context>
chip_gen: v7x
topology: tpu7x:2x2x1
jax: 0.10.0
libtpu: 0.0.40
codegen_flags: <defaults>
</compile_context>

<pallas_src>
import functools
import numpy as np
import jax
import jax.numpy as jnp
from jax.experimental import pallas as pl
from jax.experimental.pallas import tpu as pltpu


# ----------------------------------------------------------------------------- spec helpers

def _spec_const(shape):
    """Full-array block whose block index is constant across the (1-D) grid."""
    nd = len(shape)
    return pl.BlockSpec(tuple(shape), lambda l, _nd=nd: (0,) * _nd)


def _spec_stacked(shape):
    """Per-layer-stacked weight: leading layer axis selected by the grid index (and squeezed)."""
    nd = len(shape)
    return pl.BlockSpec((None,) + tuple(shape[1:]),
                        lambda l, _nd=nd: (l,) + (0,) * (_nd - 1))


_TX_NAMES = ('wqkv', 'bqkv', 'wo', 'bo', 'ln1_g', 'ln1_b',
             'w1', 'b1', 'w2', 'b2', 'ln2_g', 'ln2_b')


# ----------------------------------------------------------------------------- kernel bodies

def _layer_norm(y, g, b):
    mu = jnp.mean(y, axis=-1, keepdims=True)
    var = jnp.mean(jnp.square(y - mu), axis=-1, keepdims=True)
    return (y - mu) * jax.lax.rsqrt(var + 1e-5) * g + b


def _tx_layer_step(h, mask, wqkv_ref, bqkv_ref, wo_ref, bo_ref,
                   ln1g_ref, ln1b_ref, w1_ref, b1_ref, w2_ref, b2_ref,
                   ln2g_ref, ln2b_ref, *, num_heads):
    """One post-norm nn.TransformerEncoderLayer (ReLU FFN), key-padding-masked attention.

    h: (B, S, D) f32 residual stream.  mask: (B, 1, S) additive f32 (0 / -1e9).
    Matmul weights are bf16; accumulation, softmax and LayerNorm are f32.
    """
    B, S, D = h.shape
    hd = D // num_heads
    scale = 1.0 / float(np.sqrt(hd))
    hb = h.astype(jnp.bfloat16)

    qkv = jnp.einsum('bsd,de->bse', hb, wqkv_ref[...],
                     preferred_element_type=jnp.float32) + bqkv_ref[...]
    q = qkv[..., 0:D] * scale
    k = qkv[..., D:2 * D]
    v = qkv[..., 2 * D:3 * D].astype(jnp.bfloat16)

    # Per-head attention with the output projection accumulated per head (no lane concat).
    # (single-batch-dim einsums only — robust Mosaic lowering.)
    attn = jnp.zeros((B, S, D), jnp.float32) + bo_ref[...]
    for hh in range(num_heads):
        lo, hi = hh * hd, (hh + 1) * hd
        s = jnp.einsum('bqd,bkd->bqk',
                       q[..., lo:hi].astype(jnp.bfloat16),
                       k[..., lo:hi].astype(jnp.bfloat16),
                       preferred_element_type=jnp.float32)
        s = s + mask                                   # key-padding mask (never fully masked: cls)
        s = s - jnp.max(s, axis=-1, keepdims=True)
        p = jnp.exp(s)
        p = p * pl.reciprocal(jnp.sum(p, axis=-1, keepdims=True), approx=True)
        ctx = jnp.einsum('bqk,bkd->bqd', p.astype(jnp.bfloat16), v[..., lo:hi],
                         preferred_element_type=jnp.float32)
        attn = attn + jnp.einsum('bqd,de->bqe', ctx.astype(jnp.bfloat16),
                                 wo_ref[lo:hi, :],
                                 preferred_element_type=jnp.float32)

    x1 = _layer_norm(h + attn, ln1g_ref[...], ln1b_ref[...])

    ff = jnp.einsum('bsd,df->bsf', x1.astype(jnp.bfloat16), w1_ref[...],
                    preferred_element_type=jnp.float32) + b1_ref[...]
    ff = jnp.maximum(ff, 0.0)                          # ReLU
    ff = jnp.einsum('bsf,fd->bsd', ff.astype(jnp.bfloat16), w2_ref[...],
                    preferred_element_type=jnp.float32) + b2_ref[...]
    return _layer_norm(x1 + ff, ln2g_ref[...], ln2b_ref[...])


def _embed_kernel(patch_ref, sent_ref, flow_ref, qp_ref, pos_ref,
                  wp_ref, bp_ref, wl_ref, bl_ref, wf_ref, bf_ref, wq_ref, bq_ref,
                  flow_o, qp_o, img_o, lang_o):
    """All token-embedding linears (patch / language / flow / query-point) in one launch."""
    def proj(x_ref, w_ref, b_ref):
        x = x_ref[...].astype(jnp.bfloat16)
        return (jnp.einsum('bld,de->ble', x, w_ref[...],
                           preferred_element_type=jnp.float32) + b_ref[...])

    img_o[...] = proj(patch_ref, wp_ref, bp_ref) + pos_ref[...]   # conv(k=p,stride=p) == linear
    lang_o[...] = proj(sent_ref, wl_ref, bl_ref)
    flow_o[...] = proj(flow_ref, wf_ref, bf_ref)
    qp_o[...] = proj(qp_ref, wq_ref, bq_ref)


def _encoder_kernel(x_ref, mask_ref,
                    wqkv_ref, bqkv_ref, wo_ref, bo_ref, ln1g_ref, ln1b_ref,
                    w1_ref, b1_ref, w2_ref, b2_ref, ln2g_ref, ln2b_ref,
                    dec_base_ref, eps_ref, wz_ref, bz_ref,
                    wvis_ref, bvis_ref, wflo_ref, bflo_ref,
                    zstats_ref, img_out_ref, flow_out_ref, dec_in_ref,
                    h_ref, *, num_heads, n_query, n_patch):
    """Encoder stack (grid over layers) + latent / vision / flow heads + decoder-input build."""
    layer = pl.program_id(0)

    @pl.when(layer == 0)
    def _init():
        h_ref[...] = x_ref[...]

    h = _tx_layer_step(h_ref[...], mask_ref[...],
                       wqkv_ref, bqkv_ref, wo_ref, bo_ref, ln1g_ref, ln1b_ref,
                       w1_ref, b1_ref, w2_ref, b2_ref, ln2g_ref, ln2b_ref,
                       num_heads=num_heads)
    h_ref[...] = h

    @pl.when(layer == pl.num_programs(0) - 1)
    def _heads():
        N, P = n_query, n_patch
        D = h_ref.shape[-1]

        # Fused [z_mu | z_logvar] head on the CLS token (lane-dense 2D-wide output).
        z_tok = h_ref[:, 0:1, :].astype(jnp.bfloat16)                      # (B, 1, D)
        zs = jnp.einsum('bod,de->boe', z_tok, wz_ref[...],
                        preferred_element_type=jnp.float32) + bz_ref[...]  # (B, 1, 2D)
        col = jax.lax.broadcasted_iota(jnp.int32, zs.shape, 2)
        zs = jnp.where(col >= D, jnp.clip(zs, -10.0, 10.0), zs)            # clamp logvar half only
        zstats_ref[...] = zs

        z_mu = zs[..., :D]
        z_logvar = zs[..., D:]
        z_std = jnp.exp(0.5 * z_logvar)
        # Matches torch reference exactly: Normal(z_mu, exp(z_std)).rsample()
        z = z_mu + jnp.exp(z_std) * eps_ref[...]                           # (B, 1, D)

        # Vision decoder head on image tokens.
        img_tok = h_ref[:, 1 + N:1 + N + P, :].astype(jnp.bfloat16)
        img_out_ref[...] = jnp.einsum('bpd,de->bpe', img_tok, wvis_ref[...],
                                      preferred_element_type=jnp.float32) + bvis_ref[...]

        # Flow decoder head on flow tokens.
        flow_tok = h_ref[:, 1:1 + N, :].astype(jnp.bfloat16)
        flow_out_ref[...] = jnp.einsum('bnd,de->bne', flow_tok, wflo_ref[...],
                                       preferred_element_type=jnp.float32) + bflo_ref[...]

        # Build decoder input: slot 0 <- z, rest from the pre-built base (qp | img | lang).
        row = jax.lax.broadcasted_iota(jnp.int32, dec_base_ref.shape, 1)
        dec_in_ref[...] = jnp.where(row == 0, z, dec_base_ref[...])


def _decoder_kernel(x_ref, mask_ref,
                    wqkv_ref, bqkv_ref, wo_ref, bo_ref, ln1g_ref, ln1b_ref,
                    w1_ref, b1_ref, w2_ref, b2_ref, ln2g_ref, ln2b_ref,
                    wsd_ref, bsd_ref,
                    sd_ref, h_ref, *, num_heads, n_query, horizon):
    """Decoder stack (grid over layers) + fused [scale | direction] head."""
    layer = pl.program_id(0)

    @pl.when(layer == 0)
    def _init():
        h_ref[...] = x_ref[...]

    h = _tx_layer_step(h_ref[...], mask_ref[...],
                       wqkv_ref, bqkv_ref, wo_ref, bo_ref, ln1g_ref, ln1b_ref,
                       w1_ref, b1_ref, w2_ref, b2_ref, ln2g_ref, ln2b_ref,
                       num_heads=num_heads)
    h_ref[...] = h

    @pl.when(layer == pl.num_programs(0) - 1)
    def _heads():
        N, T = n_query, horizon
        tok = h_ref[:, 1:1 + N, :].astype(jnp.bfloat16)
        y = jnp.einsum('bnd,de->bne', tok, wsd_ref[...],
                       preferred_element_type=jnp.float32) + bsd_ref[...]   # (B, N, 3T)
        # Softplus(beta=1, threshold=20) only on the scale half [0:T]; direction half raw.
        sp = jnp.where(y > 20.0, y, jnp.log1p(jnp.exp(jnp.minimum(y, 20.0))))
        col = jax.lax.broadcasted_iota(jnp.int32, y.shape, 2)
        sd_ref[...] = jnp.where(col < T, sp, y)


# ----------------------------------------------------------------------------- pallas wrappers

def run_embed(params, patches, sentence, flow_flat, qpoints):
    B, P, _ = patches.shape
    D = params['cls_token'].shape[-1]
    N = flow_flat.shape[1]
    Lw = sentence.shape[1]
    args = [patches, sentence, flow_flat, qpoints, params['img_pos'],
            params['patch_w'], params['patch_b'],
            params['lang_w'], params['lang_b'],
            params['flow_enc_w'], params['flow_enc_b'],
            params['qp_w'], params['qp_b']]
    out_shape = (jax.ShapeDtypeStruct((B, N, D), jnp.float32),    # flow_emb
                 jax.ShapeDtypeStruct((B, N, D), jnp.float32),    # qp_emb
                 jax.ShapeDtypeStruct((B, P, D), jnp.float32),    # img_emb (+pos)
                 jax.ShapeDtypeStruct((B, Lw, D), jnp.float32))   # lang_emb
    return pl.pallas_call(
        _embed_kernel,
        out_shape=out_shape,
        grid=(1,),
        in_specs=[_spec_const(a.shape) for a in args],
        out_specs=tuple(_spec_const(s.shape) for s in out_shape),
        compiler_params=pltpu.CompilerParams(dimension_semantics=("arbitrary",)),
    )(*args)


def run_encoder(params, cfg, enc_in, add_mask, dec_base, eps, n_query, n_patch):
    B, S, D = enc_in.shape
    T = cfg['flow_horizon']
    vis_out = params['vis_dec_w'].shape[1]
    stack = params['enc']
    num_layers = stack['wqkv'].shape[0]
    layer_args = [stack[n] for n in _TX_NAMES]
    head_args = [dec_base, eps, params['z_w'], params['z_b'],
                 params['vis_dec_w'], params['vis_dec_b'],
                 params['flow_dec_w'], params['flow_dec_b']]
    in_specs = ([_spec_const(enc_in.shape), _spec_const(add_mask.shape)]
                + [_spec_stacked(a.shape) for a in layer_args]
                + [_spec_const(a.shape) for a in head_args])
    out_shape = (jax.ShapeDtypeStruct((B, 1, 2 * D), jnp.float32),         # [z_mu | z_logvar]
                 jax.ShapeDtypeStruct((B, n_patch, vis_out), jnp.float32), # img_output
                 jax.ShapeDtypeStruct((B, n_query, 2 * T), jnp.float32),   # flow_output (flat)
                 jax.ShapeDtypeStruct((B, S, D), jnp.float32))             # decoder input
    kernel = functools.partial(_encoder_kernel, num_heads=cfg['num_heads'],
                               n_query=n_query, n_patch=n_patch)
    return pl.pallas_call(
        kernel,
        out_shape=out_shape,
        grid=(num_layers,),
        in_specs=in_specs,
        out_specs=tuple(_spec_const(s.shape) for s in out_shape),
        scratch_shapes=[pltpu.VMEM((B, S, D), jnp.float32)],
        compiler_params=pltpu.CompilerParams(dimension_semantics=("arbitrary",)),
    )(enc_in, add_mask, *layer_args, *head_args)


def run_decoder(params, cfg, dec_in, add_mask, n_query):
    B, S, D = dec_in.shape
    T = cfg['flow_horizon']
    stack = params['dec']
    num_layers = stack['wqkv'].shape[0]
    layer_args = [stack[n] for n in _TX_NAMES]
    head_args = [params['sd_w'], params['sd_b']]
    in_specs = ([_spec_const(dec_in.shape), _spec_const(add_mask.shape)]
                + [_spec_stacked(a.shape) for a in layer_args]
                + [_spec_const(a.shape) for a in head_args])
    out_shape = jax.ShapeDtypeStruct((B, n_query, 3 * T), jnp.float32)     # [scale(T) | dir(2T)]
    kernel = functools.partial(_decoder_kernel, num_heads=cfg['num_heads'],
                               n_query=n_query, horizon=T)
    return pl.pallas_call(
        kernel,
        out_shape=out_shape,
        grid=(num_layers,),
        in_specs=in_specs,
        out_specs=_spec_const(out_shape.shape),
        scratch_shapes=[pltpu.VMEM((B, S, D), jnp.float32)],
        compiler_params=pltpu.CompilerParams(dimension_semantics=("arbitrary",)),
    )(dec_in, add_mask, *layer_args, *head_args)


# ----------------------------------------------------------------------------- params

def get_2d_sincos_pos_embed(embed_dim, grid_size_hw):
    h, w = grid_size_hw

    def get_1d(dim, pos):
        omega = np.arange(dim // 2, dtype=np.float64) / (dim / 2.0)
        omega = 1.0 / (10000.0 ** omega)
        out = np.einsum('m,d->md', pos.reshape(-1), omega)
        return np.concatenate([np.sin(out), np.cos(out)], axis=1)

    grid_h = np.arange(h, dtype=np.float64)
    grid_w = np.arange(w, dtype=np.float64)
    gw, gh = np.meshgrid(grid_w, grid_h)
    emb_h = get_1d(embed_dim // 2, gh)
    emb_w = get_1d(embed_dim // 2, gw)
    return np.concatenate([emb_h, emb_w], axis=1).astype(np.float32)       # (h*w, D)


def init_tx_stack(key, num_layers, d, f):
    """Per-layer weights pre-transposed to (in, out) and stacked along a leading layer axis."""
    keys = jax.random.split(key, num_layers)

    def one(k):
        k0, k1, k2, k3 = jax.random.split(k, 4)
        return dict(
            wqkv=(jax.random.normal(k0, (d, 3 * d), jnp.float32) * 0.02).astype(jnp.bfloat16),
            bqkv=jnp.zeros((1, 3 * d), jnp.float32),
            wo=(jax.random.normal(k1, (d, d), jnp.float32) * 0.02).astype(jnp.bfloat16),
            bo=jnp.zeros((1, d), jnp.float32),
            ln1_g=jnp.ones((1, d), jnp.float32), ln1_b=jnp.zeros((1, d), jnp.float32),
            w1=(jax.random.normal(k2, (d, f), jnp.float32) * 0.02).astype(jnp.bfloat16),
            b1=jnp.zeros((1, f), jnp.float32),
            w2=(jax.random.normal(k3, (f, d), jnp.float32) * 0.02).astype(jnp.bfloat16),
            b2=jnp.zeros((1, d), jnp.float32),
            ln2_g=jnp.ones((1, d), jnp.float32), ln2_b=jnp.zeros((1, d), jnp.float32),
        )

    layers = [one(k) for k in keys]
    return {name: jnp.stack([lyr[name] for lyr in layers], axis=0) for name in layers[0]}


def init_params(key, cfg):
    D = cfg['hidden']
    p = cfg['patch']
    T = cfg['flow_horizon']
    obs_h = cfg['obs_history']
    d_lang = cfg['d_lang']
    F = D                                            # dim_feedforward = hidden_size
    Hn, Wn = cfg['img_size'][0] // p, cfg['img_size'][1] // p
    patch_dim = 3 * obs_h * p * p
    vis_out = 3 * obs_h * p * p

    keys = iter(jax.random.split(key, 64))

    def w(in_d, out_d):                              # stored pre-transposed (K, N), bf16
        return (jax.random.normal(next(keys), (in_d, out_d), jnp.float32) * 0.02
                ).astype(jnp.bfloat16)

    def b(out_d):                                    # stored pre-reshaped (1, N), f32
        return jax.random.normal(next(keys), (1, out_d), jnp.float32) * 0.02

    params = dict(
        lang_w=w(d_lang, D), lang_b=b(D),
        patch_w=w(patch_dim, D), patch_b=b(D),       # conv patch-embed re-expressed as linear
        flow_enc_w=w(2 * T, D), flow_enc_b=b(D),
        qp_w=w(2, D), qp_b=b(D),
        vis_dec_w=w(D, vis_out), vis_dec_b=b(vis_out),
        flow_dec_w=w(D, 2 * T), flow_dec_b=b(2 * T),
        z_w=w(D, 2 * D), z_b=b(2 * D),               # fused [z_mu | z_logvar]
        sd_w=w(D, 3 * T), sd_b=b(3 * T),             # fused [scale(T) | direction(2T)]
        cls_token=jax.random.normal(next(keys), (1, 1, D), jnp.float32),
        img_pos=jnp.asarray(get_2d_sincos_pos_embed(D, (Hn, Wn)))[None],   # (1, P, D), frozen
    )
    params['enc'] = init_tx_stack(next(keys), cfg['enc_layers'], D, F)
    params['dec'] = init_tx_stack(next(keys), cfg['dec_layers'], D, F)
    return params


# ----------------------------------------------------------------------------- forward

def scale_direction_cvae_forward(params, cfg, gt_flow, obs_history, sentence_embedding, rng):
    """gt_flow: [B,N,T,2]  obs_history: [B,T_obs,3,H,W]  sentence_embedding: [B,L,D_lang]"""
    B, N, T, _ = gt_flow.shape
    D = cfg['hidden']
    p = cfg['patch']

    query_points = gt_flow[:, :, 0]                                    # (B, N, 2)
    flow_flat = gt_flow.reshape(B, N, 2 * T)

    # Patch extraction ('b t c h w -> b (t c) h w' + conv(k=p, stride=p) == linear on patches).
    Bv, Tv, C, Himg, Wimg = obs_history.shape
    Hn, Wn = Himg // p, Wimg // p
    P = Hn * Wn
    vid = obs_history.reshape(B, Tv * C, Himg, Wimg)
    patches = vid.reshape(B, Tv * C, Hn, p, Wn, p)
    patches = patches.transpose(0, 2, 4, 1, 3, 5).reshape(B, P, Tv * C * p * p)

    Lw = sentence_embedding.shape[1]
    S = 1 + N + P + Lw

    # --- fused embedding kernel (1 pallas_call) -------------------------------
    flow_emb, qp_emb, img_emb, lang_emb = run_embed(
        params, patches, sentence_embedding, flow_flat, query_points)

    cls = jnp.broadcast_to(params['cls_token'], (B, 1, D)).astype(jnp.float32)
    enc_in = jnp.concatenate([cls, flow_emb, img_emb, lang_emb], axis=1)           # (B, S, D)
    dec_base = jnp.concatenate(
        [jnp.zeros((B, 1, D), jnp.float32), qp_emb, img_emb, lang_emb], axis=1)    # slot 0 <- z

    padding_mask = jnp.all(sentence_embedding == 0.0, axis=-1)                     # (B, L)
    full_mask = jnp.concatenate([jnp.zeros((B, 1 + N + P), dtype=bool), padding_mask], axis=1)
    add_mask = jnp.where(full_mask, -1e9, 0.0).astype(jnp.float32)[:, None, :]     # (B, 1, S)

    eps = jax.random.normal(rng, (B, 1, D), jnp.float32)

    # --- encoder stack + latent/vision/flow heads (1 pallas_call) --------------
    zstats, img_output, flow_out, dec_in = run_encoder(
        params, cfg, enc_in, add_mask, dec_base, eps, N, P)
    z_mu = zstats[:, 0, :D]
    z_logvar = zstats[:, 0, D:]
    flow_output = flow_out.reshape(B, N, T, 2)

    # --- decoder stack + scale/direction heads (1 pallas_call) -----------------
    sd = run_decoder(params, cfg, dec_in, add_mask, N)                  # (B, N, 3T)
    scale = sd[..., :T].reshape(B, N, T, 1)[:, :, :-1]
    direction = sd[..., T:].reshape(B, N, T, 2)[:, :, :-1]
    nrm = jnp.sqrt(jnp.sum(direction ** 2, axis=-1, keepdims=True))
    direction = direction / jnp.maximum(nrm, 1e-12)                     # F.normalize(p=2, dim=-1)

    return scale, direction, z_mu, z_logvar, img_output, flow_output


# ----------------------------------------------------------------------------- main

if __name__ == "__main__":
    cfg = dict(hidden=32, num_heads=4, enc_layers=2, dec_layers=2,
               flow_horizon=16, obs_history=4, img_size=(16, 16),
               patch=8, d_lang=64)

    root = jax.random.PRNGKey(0)
    k_params, k_flow, k_obs, k_sent, k_eps = jax.random.split(root, 5)

    params = init_params(k_params, cfg)

    B, N, L = 2, 3, 4
    gt_flow = jax.random.normal(k_flow, (B, N, cfg['flow_horizon'], 2), jnp.float32)
    obs_history = jax.random.normal(
        k_obs, (B, cfg['obs_history'], 3, cfg['img_size'][0], cfg['img_size'][1]), jnp.float32)
    sentence_embedding = jax.random.normal(k_sent, (B, L, cfg['d_lang']), jnp.float32)
    sentence_embedding = sentence_embedding.at[:, -1, :].set(0.0)   # padded token -> exercises mask

    outs = scale_direction_cvae_forward(
        params, cfg, gt_flow, obs_history, sentence_embedding, k_eps)
    outs = jax.block_until_ready(outs)

    names = ["scale", "direction", "z_mu", "z_logvar", "img_output", "flow_output"]
    expected = {
        "scale": (B, N, cfg['flow_horizon'] - 1, 1),
        "direction": (B, N, cfg['flow_horizon'] - 1, 2),
        "z_mu": (B, cfg['hidden']),
        "z_logvar": (B, cfg['hidden']),
        "img_output": (B, 4, 3 * cfg['obs_history'] * cfg['patch'] ** 2),
        "flow_output": (B, N, cfg['flow_horizon'], 2),
    }
    for name, o in zip(names, outs):
        assert o.shape == expected[name], (name, o.shape, expected[name])
        assert bool(jnp.all(jnp.isfinite(o))), f"non-finite values in {name}"

    print("KERNEL_OK")
</pallas_src>

<mosaic_0001>
module attributes {stable_mosaic.version = 11 : i64} {
  func.func @_embed_kernel(%arg0: i32, %arg1: memref<2x4x768xf32, #tpu.memory_space<vmem>>, %arg2: memref<2x4x64xf32, #tpu.memory_space<vmem>>, %arg3: memref<2x3x32xf32, #tpu.memory_space<vmem>>, %arg4: memref<2x3x2xf32, #tpu.memory_space<vmem>>, %arg5: memref<1x4x32xf32, #tpu.memory_space<vmem>>, %arg6: memref<768x32xbf16, #tpu.memory_space<vmem>>, %arg7: memref<1x32xf32, #tpu.memory_space<vmem>>, %arg8: memref<64x32xbf16, #tpu.memory_space<vmem>>, %arg9: memref<1x32xf32, #tpu.memory_space<vmem>>, %arg10: memref<32x32xbf16, #tpu.memory_space<vmem>>, %arg11: memref<1x32xf32, #tpu.memory_space<vmem>>, %arg12: memref<2x32xbf16, #tpu.memory_space<vmem>>, %arg13: memref<1x32xf32, #tpu.memory_space<vmem>>, %arg14: memref<2x3x32xf32, #tpu.memory_space<vmem>>, %arg15: memref<2x3x32xf32, #tpu.memory_space<vmem>>, %arg16: memref<2x4x32xf32, #tpu.memory_space<vmem>>, %arg17: memref<2x4x32xf32, #tpu.memory_space<vmem>>) attributes {dimension_semantics = [#tpu.dimension_semantics<arbitrary>], iteration_bounds = array<i64: 1>, scalar_prefetch = 0 : i64, scratch_operands = 0 : i64, tpu.core_type = #tpu.core_type<tc>, window_params = [{pipeline_mode = #tpu.pipeline_mode<synchronous>, transform_indices = @transform_0, window_bounds = array<i64: 2, 4, 768>}, {pipeline_mode = #tpu.pipeline_mode<synchronous>, transform_indices = @transform_1, window_bounds = array<i64: 2, 4, 64>}, {pipeline_mode = #tpu.pipeline_mode<synchronous>, transform_indices = @transform_2, window_bounds = array<i64: 2, 3, 32>}, {pipeline_mode = #tpu.pipeline_mode<synchronous>, transform_indices = @transform_3, window_bounds = array<i64: 2, 3, 2>}, {pipeline_mode = #tpu.pipeline_mode<synchronous>, transform_indices = @transform_4, window_bounds = array<i64: 1, 4, 32>}, {pipeline_mode = #tpu.pipeline_mode<synchronous>, transform_indices = @transform_5, window_bounds = array<i64: 768, 32>}, {pipeline_mode = #tpu.pipeline_mode<synchronous>, transform_indices = @transform_6, window_bounds = array<i64: 1, 32>}, {pipeline_mode = #tpu.pipeline_mode<synchronous>, transform_indices = @transform_7, window_bounds = array<i64: 64, 32>}, {pipeline_mode = #tpu.pipeline_mode<synchronous>, transform_indices = @transform_8, window_bounds = array<i64: 1, 32>}, {pipeline_mode = #tpu.pipeline_mode<synchronous>, transform_indices = @transform_9, window_bounds = array<i64: 32, 32>}, {pipeline_mode = #tpu.pipeline_mode<synchronous>, transform_indices = @transform_10, window_bounds = array<i64: 1, 32>}, {pipeline_mode = #tpu.pipeline_mode<synchronous>, transform_indices = @transform_11, window_bounds = array<i64: 2, 32>}, {pipeline_mode = #tpu.pipeline_mode<synchronous>, transform_indices = @transform_12, window_bounds = array<i64: 1, 32>}, {pipeline_mode = #tpu.pipeline_mode<synchronous>, transform_indices = @transform_13, window_bounds = array<i64: 2, 3, 32>}, {pipeline_mode = #tpu.pipeline_mode<synchronous>, transform_indices = @transform_14, window_bounds = array<i64: 2, 3, 32>}, {pipeline_mode = #tpu.pipeline_mode<synchronous>, transform_indices = @transform_15, window_bounds = array<i64: 2, 4, 32>}, {pipeline_mode = #tpu.pipeline_mode<synchronous>, transform_indices = @transform_16, window_bounds = array<i64: 2, 4, 32>}]} {
    %c0 = arith.constant 0 : index
    %c0_0 = arith.constant 0 : index
    %c0_1 = arith.constant 0 : index
    %0 = vector.load %arg1[%c0, %c0_0, %c0_1] : memref<2x4x768xf32, #tpu.memory_space<vmem>>, vector<2x4x768xf32>
    %1 = arith.truncf %0 : vector<2x4x768xf32> to vector<2x4x768xbf16>
    %c0_2 = arith.constant 0 : index
    %c0_3 = arith.constant 0 : index
    %2 = vector.load %arg6[%c0_2, %c0_3] : memref<768x32xbf16, #tpu.memory_space<vmem>>, vector<768x32xbf16>
    "tpu.trace_start"() <{level = 10 : i32, message = "bld,de->ble"}> : () -> ()
    %cst = arith.constant dense<0.000000e+00> : vector<2x4x32xf32>
    %3 = tpu.matmul %1, %2, %cst {dimension_numbers = #tpu.dot_dimension_numbers<[2], [0], [0, 1], [1], [0, 0, 0, 1, 1, 1], [], []>} : vector<2x4x768xbf16>, vector<768x32xbf16>, vector<2x4x32xf32> -> vector<2x4x32xf32>
    "tpu.trace_stop"() : () -> ()
    %c0_4 = arith.constant 0 : index
    %c0_5 = arith.constant 0 : index
    %4 = vector.load %arg7[%c0_4, %c0_5] : memref<1x32xf32, #tpu.memory_space<vmem>>, vector<1x32xf32>
    %5 = vector.shape_cast %4 : vector<1x32xf32> to vector<1x1x32xf32>
    %6 = vector.broadcast %5 : vector<1x1x32xf32> to vector<2x4x32xf32>
    %7 = arith.addf %3, %6 : vector<2x4x32xf32>
    %c0_6 = arith.constant 0 : index
    %c0_7 = arith.constant 0 : index
    %c0_8 = arith.constant 0 : index
    %8 = vector.load %arg5[%c0_6, %c0_7, %c0_8] : memref<1x4x32xf32, #tpu.memory_space<vmem>>, vector<1x4x32xf32>
    %9 = vector.broadcast %8 : vector<1x4x32xf32> to vector<2x4x32xf32>
    %10 = arith.addf %7, %9 : vector<2x4x32xf32>
    %c0_9 = arith.constant 0 : index
    %c0_10 = arith.constant 0 : index
    %c0_11 = arith.constant 0 : index
    %11 = vector.load %arg16[%c0_9, %c0_10, %c0_11] : memref<2x4x32xf32, #tpu.memory_space<vmem>>, vector<2x4x32xf32>
    tpu.vector_store %arg16[%c0_9, %c0_10, %c0_11], %10 {strides = array<i32>} : memref<2x4x32xf32, #tpu.memory_space<vmem>>, vector<2x4x32xf32>,
    %c0_12 = arith.constant 0 : index
    %c0_13 = arith.constant 0 : index
    %c0_14 = arith.constant 0 : index
    %12 = vector.load %arg2[%c0_12, %c0_13, %c0_14] : memref<2x4x64xf32, #tpu.memory_space<vmem>>, vector<2x4x64xf32>
    %13 = arith.truncf %12 : vector<2x4x64xf32> to vector<2x4x64xbf16>
    %c0_15 = arith.constant 0 : index
    %c0_16 = arith.constant 0 : index
    %14 = vector.load %arg8[%c0_15, %c0_16] : memref<64x32xbf16, #tpu.memory_space<vmem>>, vector<64x32xbf16>
    "tpu.trace_start"() <{level = 10 : i32, message = "bld,de->ble"}> : () -> ()
    %cst_17 = arith.constant dense<0.000000e+00> : vector<2x4x32xf32>
    %15 = tpu.matmul %13, %14, %cst_17 {dimension_numbers = #tpu.dot_dimension_numbers<[2], [0], [0, 1], [1], [0, 0, 0, 1, 1, 1], [], []>} : vector<2x4x64xbf16>, vector<64x32xbf16>, vector<2x4x32xf32> -> vector<2x4x32xf32>
    "tpu.trace_stop"() : () -> ()
    %c0_18 = arith.constant 0 : index
    %c0_19 = arith.constant 0 : index
    %16 = vector.load %arg9[%c0_18, %c0_19] : memref<1x32xf32, #tpu.memory_space<vmem>>, vector<1x32xf32>
    %17 = vector.shape_cast %16 : vector<1x32xf32> to vector<1x1x32xf32>
    %18 = vector.broadcast %17 : vector<1x1x32xf32> to vector<2x4x32xf32>
    %19 = arith.addf %15, %18 : vector<2x4x32xf32>
    %c0_20 = arith.constant 0 : index
    %c0_21 = arith.constant 0 : index
    %c0_22 = arith.constant 0 : index
    %20 = vector.load %arg17[%c0_20, %c0_21, %c0_22] : memref<2x4x32xf32, #tpu.memory_space<vmem>>, vector<2x4x32xf32>
    tpu.vector_store %arg17[%c0_20, %c0_21, %c0_22], %19 {strides = array<i32>} : memref<2x4x32xf32, #tpu.memory_space<vmem>>, vector<2x4x32xf32>,
    %c0_23 = arith.constant 0 : index
    %c0_24 = arith.constant 0 : index
    %c0_25 = arith.constant 0 : index
    %21 = vector.load %arg3[%c0_23, %c0_24, %c0_25] : memref<2x3x32xf32, #tpu.memory_space<vmem>>, vector<2x3x32xf32>
    %22 = arith.truncf %21 : vector<2x3x32xf32> to vector<2x3x32xbf16>
    %c0_26 = arith.constant 0 : index
    %c0_27 = arith.constant 0 : index
    %23 = vector.load %arg10[%c0_26, %c0_27] : memref<32x32xbf16, #tpu.memory_space<vmem>>, vector<32x32xbf16>
    "tpu.trace_start"() <{level = 10 : i32, message = "bld,de->ble"}> : () -> ()
    %cst_28 = arith.constant dense<0.000000e+00> : vector<2x3x32xf32>
    %24 = tpu.matmul %22, %23, %cst_28 {dimension_numbers = #tpu.dot_dimension_numbers<[2], [0], [0, 1], [1], [0, 0, 0, 1, 1, 1], [], []>} : vector<2x3x32xbf16>, vector<32x32xbf16>, vector<2x3x32xf32> -> vector<2x3x32xf32>
    "tpu.trace_stop"() : () -> ()
    %c0_29 = arith.constant 0 : index
    %c0_30 = arith.constant 0 : index
    %25 = vector.load %arg11[%c0_29, %c0_30] : memref<1x32xf32, #tpu.memory_space<vmem>>, vector<1x32xf32>
    %26 = vector.shape_cast %25 : vector<1x32xf32> to vector<1x1x32xf32>
    %27 = vector.broadcast %26 : vector<1x1x32xf32> to vector<2x3x32xf32>
    %28 = arith.addf %24, %27 : vector<2x3x32xf32>
    %c0_31 = arith.constant 0 : index
    %c0_32 = arith.constant 0 : index
    %c0_33 = arith.constant 0 : index
    %29 = vector.load %arg14[%c0_31, %c0_32, %c0_33] : memref<2x3x32xf32, #tpu.memory_space<vmem>>, vector<2x3x32xf32>
    tpu.vector_store %arg14[%c0_31, %c0_32, %c0_33], %28 {strides = array<i32>} : memref<2x3x32xf32, #tpu.memory_space<vmem>>, vector<2x3x32xf32>,
    %c0_34 = arith.constant 0 : index
    %c0_35 = arith.constant 0 : index
    %c0_36 = arith.constant 0 : index
    %30 = vector.load %arg4[%c0_34, %c0_35, %c0_36] : memref<2x3x2xf32, #tpu.memory_space<vmem>>, vector<2x3x2xf32>
    %31 = arith.truncf %30 : vector<2x3x2xf32> to vector<2x3x2xbf16>
    %c0_37 = arith.constant 0 : index
    %c0_38 = arith.constant 0 : index
    %32 = vector.load %arg12[%c0_37, %c0_38] : memref<2x32xbf16, #tpu.memory_space<vmem>>, vector<2x32xbf16>
    "tpu.trace_start"() <{level = 10 : i32, message = "bld,de->ble"}> : () -> ()
    %cst_39 = arith.constant dense<0.000000e+00> : vector<2x3x32xf32>
    %33 = tpu.matmul %31, %32, %cst_39 {dimension_numbers = #tpu.dot_dimension_numbers<[2], [0], [0, 1], [1], [0, 0, 0, 1, 1, 1], [], []>} : vector<2x3x2xbf16>, vector<2x32xbf16>, vector<2x3x32xf32> -> vector<2x3x32xf32>
    "tpu.trace_stop"() : () -> ()
    %c0_40 = arith.constant 0 : index
    %c0_41 = arith.constant 0 : index
    %34 = vector.load %arg13[%c0_40, %c0_41] : memref<1x32xf32, #tpu.memory_space<vmem>>, vector<1x32xf32>
    %35 = vector.shape_cast %34 : vector<1x32xf32> to vector<1x1x32xf32>
    %36 = vector.broadcast %35 : vector<1x1x32xf32> to vector<2x3x32xf32>
    %37 = arith.addf %33, %36 : vector<2x3x32xf32>
    %c0_42 = arith.constant 0 : index
    %c0_43 = arith.constant 0 : index
    %c0_44 = arith.constant 0 : index
    %38 = vector.load %arg15[%c0_42, %c0_43, %c0_44] : memref<2x3x32xf32, #tpu.memory_space<vmem>>, vector<2x3x32xf32>
    tpu.vector_store %arg15[%c0_42, %c0_43, %c0_44], %37 {strides = array<i32>} : memref<2x3x32xf32, #tpu.memory_space<vmem>>, vector<2x3x32xf32>,
    return
  }
  func.func @transform_0(%arg0: i32) -> (i32, i32, i32) {
    %c0_i32 = arith.constant 0 : i32
    %c0_i32_0 = arith.constant 0 : i32
    %c0_i32_1 = arith.constant 0 : i32
    %c0_i32_2 = arith.constant 0 : i32
    return %c0_i32, %c0_i32_0, %c0_i32_1 : i32, i32, i32
  }
  func.func @transform_1(%arg0: i32) -> (i32, i32, i32) {
    %c0_i32 = arith.constant 0 : i32
    %c0_i32_0 = arith.constant 0 : i32
    %c0_i32_1 = arith.constant 0 : i32
    %c0_i32_2 = arith.constant 0 : i32
    return %c0_i32, %c0_i32_0, %c0_i32_1 : i32, i32, i32
  }
  func.func @transform_2(%arg0: i32) -> (i32, i32, i32) {
    %c0_i32 = arith.constant 0 : i32
    %c0_i32_0 = arith.constant 0 : i32
    %c0_i32_1 = arith.constant 0 : i32
    %c0_i32_2 = arith.constant 0 : i32
    return %c0_i32, %c0_i32_0, %c0_i32_1 : i32, i32, i32
  }
  func.func @transform_3(%arg0: i32) -> (i32, i32, i32) {
    %c0_i32 = arith.constant 0 : i32
    %c0_i32_0 = arith.constant 0 : i32
    %c0_i32_1 = arith.constant 0 : i32
    %c0_i32_2 = arith.constant 0 : i32
    return %c0_i32, %c0_i32_0, %c0_i32_1 : i32, i32, i32
  }
  func.func @transform_4(%arg0: i32) -> (i32, i32, i32) {
    %c0_i32 = arith.constant 0 : i32
    %c0_i32_0 = arith.constant 0 : i32
    %c0_i32_1 = arith.constant 0 : i32
    %c0_i32_2 = arith.constant 0 : i32
    return %c0_i32, %c0_i32_0, %c0_i32_1 : i32, i32, i32
  }
  func.func @transform_5(%arg0: i32) -> (i32, i32) {
    %c0_i32 = arith.constant 0 : i32
    %c0_i32_0 = arith.constant 0 : i32
    %c0_i32_1 = arith.constant 0 : i32
    return %c0_i32, %c0_i32_0 : i32, i32
  }
  func.func @transform_6(%arg0: i32) -> (i32, i32) {
    %c0_i32 = arith.constant 0 : i32
    %c0_i32_0 = arith.constant 0 : i32
    %c0_i32_1 = arith.constant 0 : i32
    return %c0_i32, %c0_i32_0 : i32, i32
  }
  func.func @transform_7(%arg0: i32) -> (i32, i32) {
    %c0_i32 = arith.constant 0 : i32
    %c0_i32_0 = arith.constant 0 : i32
    %c0_i32_1 = arith.constant 0 : i32
    return %c0_i32, %c0_i32_0 : i32, i32
  }
  func.func @transform_8(%arg0: i32) -> (i32, i32) {
    %c0_i32 = arith.constant 0 : i32
    %c0_i32_0 = arith.constant 0 : i32
    %c0_i32_1 = arith.constant 0 : i32
    return %c0_i32, %c0_i32_0 : i32, i32
  }
  func.func @transform_9(%arg0: i32) -> (i32, i32) {
    %c0_i32 = arith.constant 0 : i32
    %c0_i32_0 = arith.constant 0 : i32
    %c0_i32_1 = arith.constant 0 : i32
    return %c0_i32, %c0_i32_0 : i32, i32
  }
  func.func @transform_10(%arg0: i32) -> (i32, i32) {
    %c0_i32 = arith.constant 0 : i32
    %c0_i32_0 = arith.constant 0 : i32
    %c0_i32_1 = arith.constant 0 : i32
    return %c0_i32, %c0_i32_0 : i32, i32
  }
  func.func @transform_11(%arg0: i32) -> (i32, i32) {
    %c0_i32 = arith.constant 0 : i32
    %c0_i32_0 = arith.constant 0 : i32
    %c0_i32_1 = arith.constant 0 : i32
    return %c0_i32, %c0_i32_0 : i32, i32
  }
  func.func @transform_12(%arg0: i32) -> (i32, i32) {
    %c0_i32 = arith.constant 0 : i32
    %c0_i32_0 = arith.constant 0 : i32
    %c0_i32_1 = arith.constant 0 : i32
    return %c0_i32, %c0_i32_0 : i32, i32
  }
  func.func @transform_13(%arg0: i32) -> (i32, i32, i32) {
    %c0_i32 = arith.constant 0 : i32
    %c0_i32_0 = arith.constant 0 : i32
    %c0_i32_1 = arith.constant 0 : i32
    %c0_i32_2 = arith.constant 0 : i32
    return %c0_i32, %c0_i32_0, %c0_i32_1 : i32, i32, i32
  }
  func.func @transform_14(%arg0: i32) -> (i32, i32, i32) {
    %c0_i32 = arith.constant 0 : i32
    %c0_i32_0 = arith.constant 0 : i32
    %c0_i32_1 = arith.constant 0 : i32
    %c0_i32_2 = arith.constant 0 : i32
    return %c0_i32, %c0_i32_0, %c0_i32_1 : i32, i32, i32
  }
  func.func @transform_15(%arg0: i32) -> (i32, i32, i32) {
    %c0_i32 = arith.constant 0 : i32
    %c0_i32_0 = arith.constant 0 : i32
    %c0_i32_1 = arith.constant 0 : i32
    %c0_i32_2 = arith.constant 0 : i32
    return %c0_i32, %c0_i32_0, %c0_i32_1 : i32, i32, i32
  }
  func.func @transform_16(%arg0: i32) -> (i32, i32, i32) {
    %c0_i32 = arith.constant 0 : i32
    %c0_i32_0 = arith.constant 0 : i32
    %c0_i32_1 = arith.constant 0 : i32
    %c0_i32_2 = arith.constant 0 : i32
    return %c0_i32, %c0_i32_0, %c0_i32_1 : i32, i32, i32
  }
}

</mosaic_0001>

<llo_original>
// kernel: tpu_custom_call.1
$region0: #{tpu_custom_call.1}
  #allocation0 [shape = 'u32[]', space=smem, size = 0x4, offset = 0x4, fixed_abs, tag = 'smem constant byte address 0x4 - core index']
  #allocation1 [shape = 'u32[144,128]{1,0:T(1,128)}', space=vmem, size = 0x12000, scoped, tag = 'internal scratch']
  %s0 = inlined_call_operand.vmem [shape: f32[2,4,768], index: 0, kind: input, shape index: {}]
  %s1 = inlined_call_operand.vmem [shape: f32[2,4,64], index: 1, kind: input, shape index: {}]
  %s2 = inlined_call_operand.vmem [shape: f32[2,3,32], index: 2, kind: input, shape index: {}]
  %s3 = inlined_call_operand.vmem [shape: f32[2,3,2], index: 3, kind: input, shape index: {}]
  %s4 = inlined_call_operand.vmem [shape: f32[1,4,32], index: 4, kind: input, shape index: {}]
  %s5 = inlined_call_operand.vmem [shape: bf16[768,32], index: 5, kind: input, shape index: {}]
  %s6 = inlined_call_operand.vmem [shape: f32[1,32], index: 6, kind: input, shape index: {}]
  %s7 = inlined_call_operand.vmem [shape: bf16[64,32], index: 7, kind: input, shape index: {}]
  %s8 = inlined_call_operand.vmem [shape: f32[1,32], index: 8, kind: input, shape index: {}]
  %s9 = inlined_call_operand.vmem [shape: bf16[32,32], index: 9, kind: input, shape index: {}]
  %s10 = inlined_call_operand.vmem [shape: f32[1,32], index: 10, kind: input, shape index: {}]
  %s11 = inlined_call_operand.vmem [shape: bf16[2,32], index: 11, kind: input, shape index: {}]
  %s12 = inlined_call_operand.vmem [shape: f32[1,32], index: 12, kind: input, shape index: {}]
  %s13 = inlined_call_operand.vmem [shape: f32[2,3,32], index: 13, kind: output, shape index: {0}]
  %s14 = inlined_call_operand.vmem [shape: f32[2,3,32], index: 14, kind: output, shape index: {1}]
  %s15 = inlined_call_operand.hbm [shape: f32[2,4,32], index: 15, kind: output, shape index: {2}]
  %s16 = inlined_call_operand.hbm [shape: f32[2,4,32], index: 16, kind: output, shape index: {3}]
  %17 = xla_tuple %s13, %s14, %s15, %s16
  %s18 = sld [smem:[#allocation0]]
  $region86: #{tpu_custom_call.1} parent=0
    _
  %s20 = ssub.s32 1, %s18
  %s21 = scalar_select 0, %s20, %s18
  $region1: #{tpu_custom_call.1} parent=0
    #allocation2 [shape = 'u8[4096]{0}', space=vmem, size = 0x1000, scoped, tag = 'output window, operand 2, single buffered']
    #allocation3 [shape = 's32[1]{0}', space=sflag, size = 0x4, scoped, tag = 'scoped memory for tpu_custom_call.1']
    #allocation4 [shape = 'u8[4096]{0}', space=vmem, size = 0x1000, scoped, tag = 'output window, operand 3, single buffered']
    #allocation5 [shape = 's32[1]{0}', space=sflag, size = 0x4, scoped, tag = 'scoped memory for tpu_custom_call.1']
    %22 = vsyncpa [#allocation3], 0
    %23 = vsyncpa [#allocation5], 0
    // Predicated region
    $region2: #{tpu_custom_call.1} parent=1 // pred_check
      _
    $region3: #{tpu_custom_call.1} parent=1 // pred_check_branch
      %25 = sbr.rel (0) target = $region5
    $region4: #{tpu_custom_call.1} parent=1 // pred_region
      _
    $region5: #{tpu_custom_call.1} parent=1 // pred_fallthru
      _
    // Predicated region
    $region6: #{tpu_custom_call.1} parent=1 // pred_check
      _
    $region7: #{tpu_custom_call.1} parent=1 // pred_check_branch
      %27 = sbr.rel (0) target = $region9
    $region8: #{tpu_custom_call.1} parent=1 // pred_region
      _
    $region9: #{tpu_custom_call.1} parent=1 // pred_fallthru
      _
    // Predicated region
    $region10: #{tpu_custom_call.1} parent=1 // pred_check
      _
    $region11: #{tpu_custom_call.1} parent=1 // pred_check_branch
      %29 = sbr.rel (0) target = $region13
    $region12: #{tpu_custom_call.1} parent=1 // pred_region
      _
    $region13: #{tpu_custom_call.1} parent=1 // pred_fallthru
      _
    // Predicated region
    $region14: #{tpu_custom_call.1} parent=1 // pred_check
      _
    $region15: #{tpu_custom_call.1} parent=1 // pred_check_branch
      %31 = sbr.rel (0) target = $region17
    $region16: #{tpu_custom_call.1} parent=1 // pred_region
      _
    $region17: #{tpu_custom_call.1} parent=1 // pred_fallthru
      _
    // Predicated region
    $region18: #{tpu_custom_call.1} parent=1 // pred_check
      _
    $region19: #{tpu_custom_call.1} parent=1 // pred_check_branch
      %33 = sbr.rel (0) target = $region21
    $region20: #{tpu_custom_call.1} parent=1 // pred_region
      _
    $region21: #{tpu_custom_call.1} parent=1 // pred_fallthru
      _
    // Predicated region
    $region22: #{tpu_custom_call.1} parent=1 // pred_check
      _
    $region23: #{tpu_custom_call.1} parent=1 // pred_check_branch
      %35 = sbr.rel (0) target = $region25
    $region24: #{tpu_custom_call.1} parent=1 // pred_region
      _
    $region25: #{tpu_custom_call.1} parent=1 // pred_fallthru
      _
    // Predicated region
    $region26: #{tpu_custom_call.1} parent=1 // pred_check
      _
    $region27: #{tpu_custom_call.1} parent=1 // pred_check_branch
      %37 = sbr.rel (0) target = $region29
    $region28: #{tpu_custom_call.1} parent=1 // pred_region
      _
    $region29: #{tpu_custom_call.1} parent=1 // pred_fallthru
      _
    // Predicated region
    $region30: #{tpu_custom_call.1} parent=1 // pred_check
      _
    $region31: #{tpu_custom_call.1} parent=1 // pred_check_branch
      %39 = sbr.rel (0) target = $region33
    $region32: #{tpu_custom_call.1} parent=1 // pred_region
      _
    $region33: #{tpu_custom_call.1} parent=1 // pred_fallthru
      _
    // Predicated region
    $region34: #{tpu_custom_call.1} parent=1 // pred_check
      _
    $region35: #{tpu_custom_call.1} parent=1 // pred_check_branch
      %41 = sbr.rel (0) target = $region37
    $region36: #{tpu_custom_call.1} parent=1 // pred_region
      _
    $region37: #{tpu_custom_call.1} parent=1 // pred_fallthru
      _
    // Predicated region
    $region38: #{tpu_custom_call.1} parent=1 // pred_check
      _
    $region39: #{tpu_custom_call.1} parent=1 // pred_check_branch
      %43 = sbr.rel (0) target = $region41
    $region40: #{tpu_custom_call.1} parent=1 // pred_region
      _
    $region41: #{tpu_custom_call.1} parent=1 // pred_fallthru
      _
    // Predicated region
    $region42: #{tpu_custom_call.1} parent=1 // pred_check
      _
    $region43: #{tpu_custom_call.1} parent=1 // pred_check_branch
      %45 = sbr.rel (0) target = $region45
    $region44: #{tpu_custom_call.1} parent=1 // pred_region
      _
    $region45: #{tpu_custom_call.1} parent=1 // pred_fallthru
      _
    // Predicated region
    $region46: #{tpu_custom_call.1} parent=1 // pred_check
      _
    $region47: #{tpu_custom_call.1} parent=1 // pred_check_branch
      %47 = sbr.rel (0) target = $region49
    $region48: #{tpu_custom_call.1} parent=1 // pred_region
      _
    $region49: #{tpu_custom_call.1} parent=1 // pred_fallthru
      _
    // Predicated region
    $region50: #{tpu_custom_call.1} parent=1 // pred_check
      _
    $region51: #{tpu_custom_call.1} parent=1 // pred_check_branch
      %49 = sbr.rel (0) target = $region53
    $region52: #{tpu_custom_call.1} parent=1 // pred_region
      _
    $region53: #{tpu_custom_call.1} parent=1 // pred_fallthru
      _
    %v51 = vld [vmem:[%s0] sm:$0xff]
    %v52 = vld [vmem:[%s0 + $0x8] sm:$0xff]
    %v53 = vld [vmem:[%s0 + $0x10] sm:$0xff]
    %v54 = vld [vmem:[%s0 + $0x18] sm:$0xff]
    %v55 = vld [vmem:[%s0 + $0x20] sm:$0xff]
    %v56 = vld [vmem:[%s0 + $0x28] sm:$0xff]
    %v63 = vcombine.high %v51, %v51
    %v64 = vcombine.high %v52, %v52
    %v65 = vcombine.high %v53, %v53
    %v66 = vcombine.high %v54, %v54
    %v67 = vcombine.high %v55, %v55
    %v68 = vcombine.high %v56, %v56
    %v75 = vpack.c.bf16 %v51, %v51
    %v76 = vpack.c.bf16 %v63, %v63
    %v77 = vpack.c.bf16 %v52, %v52
    %v78 = vpack.c.bf16 %v64, %v64
    %v79 = vpack.c.bf16 %v53, %v53
    %v80 = vpack.c.bf16 %v65, %v65
    %v81 = vpack.c.bf16 %v54, %v54
    %v82 = vpack.c.bf16 %v66, %v66
    %v83 = vpack.c.bf16 %v55, %v55
    %v84 = vpack.c.bf16 %v67, %v67
    %v85 = vpack.c.bf16 %v56, %v56
    %v86 = vpack.c.bf16 %v68, %v68
    %v87 = vld [vmem:[%s5] sm:$0xf]
    %v88 = vld [vmem:[%s5 + $0x4] sm:$0xf]
    %v89 = vld [vmem:[%s5 + $0x8] sm:$0xf]
    %v90 = vld [vmem:[%s5 + $0xc] sm:$0xf]
    %v91 = vld [vmem:[%s5 + $0x10] sm:$0xf]
    %v92 = vld [vmem:[%s5 + $0x14] sm:$0xf]
    %v93 = vld [vmem:[%s5 + $0x18] sm:$0xf]
    %v94 = vld [vmem:[%s5 + $0x1c] sm:$0xf]
    %v95 = vld [vmem:[%s5 + $0x20] sm:$0xf]
    %v96 = vld [vmem:[%s5 + $0x24] sm:$0xf]
    %v97 = vld [vmem:[%s5 + $0x28] sm:$0xf]
    %v98 = vld [vmem:[%s5 + $0x2c] sm:$0xf]
    %v99 = vld [vmem:[%s5 + $0x30] sm:$0xf]
    %v100 = vld [vmem:[%s5 + $0x34] sm:$0xf]
    %v101 = vld [vmem:[%s5 + $0x38] sm:$0xf]
    %v102 = vld [vmem:[%s5 + $0x3c] sm:$0xf]
    %v103 = vld [vmem:[%s5 + $0x40] sm:$0xf]
    %v104 = vld [vmem:[%s5 + $0x44] sm:$0xf]
    %v105 = vld [vmem:[%s5 + $0x48] sm:$0xf]
    %v106 = vld [vmem:[%s5 + $0x4c] sm:$0xf]
    %v107 = vld [vmem:[%s5 + $0x50] sm:$0xf]
    %v108 = vld [vmem:[%s5 + $0x54] sm:$0xf]
    %v109 = vld [vmem:[%s5 + $0x58] sm:$0xf]
    %v110 = vld [vmem:[%s5 + $0x5c] sm:$0xf]
    %v111 = vld [vmem:[%s5 + $0x60] sm:$0xf]
    %v112 = vld [vmem:[%s5 + $0x64] sm:$0xf]
    %v113 = vld [vmem:[%s5 + $0x68] sm:$0xf]
    %v114 = vld [vmem:[%s5 + $0x6c] sm:$0xf]
    %v115 = vld [vmem:[%s5 + $0x70] sm:$0xf]
    %v116 = vld [vmem:[%s5 + $0x74] sm:$0xf]
    %v117 = vld [vmem:[%s5 + $0x78] sm:$0xf]
    %v118 = vld [vmem:[%s5 + $0x7c] sm:$0xf]
    %v119 = vld [vmem:[%s5 + $0x80] sm:$0xf]
    %v120 = vld [vmem:[%s5 + $0x84] sm:$0xf]
    %v121 = vld [vmem:[%s5 + $0x88] sm:$0xf]
    %v122 = vld [vmem:[%s5 + $0x8c] sm:$0xf]
    %v123 = vld [vmem:[%s5 + $0x90] sm:$0xf]
    %v124 = vld [vmem:[%s5 + $0x94] sm:$0xf]
    %v125 = vld [vmem:[%s5 + $0x98] sm:$0xf]
    %v126 = vld [vmem:[%s5 + $0x9c] sm:$0xf]
    %v127 = vld [vmem:[%s5 + $0xa0] sm:$0xf]
    %v128 = vld [vmem:[%s5 + $0xa4] sm:$0xf]
    %v129 = vld [vmem:[%s5 + $0xa8] sm:$0xf]
    %v130 = vld [vmem:[%s5 + $0xac] sm:$0xf]
    %v131 = vld [vmem:[%s5 + $0xb0] sm:$0xf]
    %v132 = vld [vmem:[%s5 + $0xb4] sm:$0xf]
    %v133 = vld [vmem:[%s5 + $0xb8] sm:$0xf]
    %v134 = vld [vmem:[%s5 + $0xbc] sm:$0xf]
    %v135 = vld [vmem:[%s5 + $0xc0] sm:$0xf]
    %v136 = vld [vmem:[%s5 + $0xc4] sm:$0xf]
    %v137 = vld [vmem:[%s5 + $0xc8] sm:$0xf]
    %v138 = vld [vmem:[%s5 + $0xcc] sm:$0xf]
    %v139 = vld [vmem:[%s5 + $0xd0] sm:$0xf]
    %v140 = vld [vmem:[%s5 + $0xd4] sm:$0xf]
    %v141 = vld [vmem:[%s5 + $0xd8] sm:$0xf]
    %v142 = vld [vmem:[%s5 + $0xdc] sm:$0xf]
    %v143 = vld [vmem:[%s5 + $0xe0] sm:$0xf]
    %v144 = vld [vmem:[%s5 + $0xe4] sm:$0xf]
    %v145 = vld [vmem:[%s5 + $0xe8] sm:$0xf]
    %v146 = vld [vmem:[%s5 + $0xec] sm:$0xf]
    %v147 = vld [vmem:[%s5 + $0xf0] sm:$0xf]
    %v148 = vld [vmem:[%s5 + $0xf4] sm:$0xf]
    %v149 = vld [vmem:[%s5 + $0xf8] sm:$0xf]
    %v150 = vld [vmem:[%s5 + $0xfc] sm:$0xf]
    %v151 = vld [vmem:[%s5 + $0x100] sm:$0xf]
    %v152 = vld [vmem:[%s5 + $0x104] sm:$0xf]
    %v153 = vld [vmem:[%s5 + $0x108] sm:$0xf]
    %v154 = vld [vmem:[%s5 + $0x10c] sm:$0xf]
    %v155 = vld [vmem:[%s5 + $0x110] sm:$0xf]
    %v156 = vld [vmem:[%s5 + $0x114] sm:$0xf]
    %v157 = vld [vmem:[%s5 + $0x118] sm:$0xf]
    %v158 = vld [vmem:[%s5 + $0x11c] sm:$0xf]
    %v159 = vld [vmem:[%s5 + $0x120] sm:$0xf]
    %v160 = vld [vmem:[%s5 + $0x124] sm:$0xf]
    %v161 = vld [vmem:[%s5 + $0x128] sm:$0xf]
    %v162 = vld [vmem:[%s5 + $0x12c] sm:$0xf]
    %v163 = vld [vmem:[%s5 + $0x130] sm:$0xf]
    %v164 = vld [vmem:[%s5 + $0x134] sm:$0xf]
    %v165 = vld [vmem:[%s5 + $0x138] sm:$0xf]
    %v166 = vld [vmem:[%s5 + $0x13c] sm:$0xf]
    %v167 = vld [vmem:[%s5 + $0x140] sm:$0xf]
    %v168 = vld [vmem:[%s5 + $0x144] sm:$0xf]
    %v169 = vld [vmem:[%s5 + $0x148] sm:$0xf]
    %v170 = vld [vmem:[%s5 + $0x14c] sm:$0xf]
    %v171 = vld [vmem:[%s5 + $0x150] sm:$0xf]
    %v172 = vld [vmem:[%s5 + $0x154] sm:$0xf]
    %v173 = vld [vmem:[%s5 + $0x158] sm:$0xf]
    %v174 = vld [vmem:[%s5 + $0x15c] sm:$0xf]
    %v175 = vld [vmem:[%s5 + $0x160] sm:$0xf]
    %v176 = vld [vmem:[%s5 + $0x164] sm:$0xf]
    %v177 = vld [vmem:[%s5 + $0x168] sm:$0xf]
    %v178 = vld [vmem:[%s5 + $0x16c] sm:$0xf]
    %v179 = vld [vmem:[%s5 + $0x170] sm:$0xf]
    %v180 = vld [vmem:[%s5 + $0x174] sm:$0xf]
    %v181 = vld [vmem:[%s5 + $0x178] sm:$0xf]
    %v182 = vld [vmem:[%s5 + $0x17c] sm:$0xf]
    %v183 = vld [vmem:[%s6] sm:$0x1]
    %v185 = vlaneseq
    %v186 = vshrl.u32 %v185, 7
    %v187 = vsub.s32 0, %v186
    %v188 = vrot.slane %v183, %v187
    %v201 = vcombine.low %v75, %v76
    %v202 = vcombine.low %v77, %v78
    %v204 = vunpack.c.l.s4 1983009808
    %v205 = vunpack.c.0.s8 %v204
    %v206 = vlaneseq
    %v207 = vshrl.u32 %v206, 7
    %v208 = vsub.s32 %v205, %v207
    %v209 = vrot.slane %v201, %v208
    %v211 = vunpack.c.l.s4 1983009808
    %v212 = vunpack.c.0.s8 %v211
    %v213 = vlaneseq
    %v214 = vshrl.u32 %v213, 7
    %v215 = vsub.s32 %v212, %v214
    %v216 = vrot.slane %v202, %v215
    %v217 = vcombine.low %v209, %v216
    %v218 = vcombine.low %v79, %v80
    %v220 = vunpack.c.l.s4 1983009808
    %v221 = vunpack.c.0.s8 %v220
    %v222 = vlaneseq
    %v223 = vshrl.u32 %v222, 7
    %v224 = vsub.s32 %v221, %v223
    %v225 = vrot.slane %v218, %v224
    %v226 = vcombine.low %v81, %v82
    %v227 = vcombine.low %v83, %v84
    %v229 = vunpack.c.l.s4 1983009808
    %v230 = vunpack.c.0.s8 %v229
    %v231 = vlaneseq
    %v232 = vshrl.u32 %v231, 7
    %v233 = vsub.s32 %v230, %v232
    %v234 = vrot.slane %v226, %v233
    %v236 = vunpack.c.l.s4 1983009808
    %v237 = vunpack.c.0.s8 %v236
    %v238 = vlaneseq
    %v239 = vshrl.u32 %v238, 7
    %v240 = vsub.s32 %v237, %v239
    %v241 = vrot.slane %v227, %v240
    %v242 = vcombine.low %v234, %v241
    %v243 = vcombine.low %v85, %v86
    %v245 = vunpack.c.l.s4 1983009808
    %v246 = vunpack.c.0.s8 %v245
    %v247 = vlaneseq
    %v248 = vshrl.u32 %v247, 7
    %v249 = vsub.s32 %v246, %v248
    %v250 = vrot.slane %v243, %v249
    %v251 = vcombine.low %v217, %v242
    %v252 = vcombine.high %v217, %v242
    %v254 = vunpack.c.l.s4 1983009808
    %v255 = vunpack.c.0.s8 %v254
    %v256 = vlaneseq
    %v257 = vshrl.u32 %v256, 7
    %v258 = vsub.s32 %v255, %v257
    %v259 = vrot.slane %v251, %v258
    %v261 = vunpack.c.l.s4 1983009808
    %v262 = vunpack.c.0.s8 %v261
    %v263 = vlaneseq
    %v264 = vshrl.u32 %v263, 7
    %v265 = vsub.s32 %v262, %v264
    %v266 = vrot.slane %v252, %v265
    %v267 = vcombine.high %v259, %v259
    %v268 = vcombine.high %v266, %v266
    %v269 = vcombine.low %v225, %v250
    %v271 = vunpack.c.l.s4 1983009808
    %v272 = vunpack.c.0.s8 %v271
    %v273 = vlaneseq
    %v274 = vshrl.u32 %v273, 7
    %v275 = vsub.s32 %v272, %v274
    %v276 = vrot.slane %v269, %v275
    %v277 = vcombine.high %v276, %v276
    %v380 = vunpack.c.l.b16 %v87
    %v381 = vunpack.c.l.b16 %v88
    %v382 = vunpack.c.l.b16 %v89
    %v383 = vunpack.c.l.b16 %v90
    %v384 = vunpack.c.l.b16 %v91
    %v385 = vunpack.c.l.b16 %v92
    %v386 = vunpack.c.l.b16 %v93
    %v387 = vunpack.c.l.b16 %v94
    %v388 = vunpack.c.l.b16 %v95
    %v389 = vunpack.c.l.b16 %v96
    %v390 = vunpack.c.l.b16 %v97
    %v391 = vunpack.c.l.b16 %v98
    %v392 = vunpack.c.l.b16 %v99
    %v393 = vunpack.c.l.b16 %v100
    %v394 = vunpack.c.l.b16 %v101
    %v395 = vunpack.c.l.b16 %v102
    %v396 = vunpack.c.l.b16 %v103
    %v397 = vunpack.c.l.b16 %v104
    %v398 = vunpack.c.l.b16 %v105
    %v399 = vunpack.c.l.b16 %v106
    %v400 = vunpack.c.l.b16 %v107
    %v401 = vunpack.c.l.b16 %v108
    %v402 = vunpack.c.l.b16 %v109
    %v403 = vunpack.c.l.b16 %v110
    %v404 = vunpack.c.l.b16 %v111
    %v405 = vunpack.c.l.b16 %v112
    %v406 = vunpack.c.l.b16 %v113
    %v407 = vunpack.c.l.b16 %v114
    %v408 = vunpack.c.l.b16 %v115
    %v409 = vunpack.c.l.b16 %v116
    %v410 = vunpack.c.l.b16 %v117
    %v411 = vunpack.c.l.b16 %v118
    %v412 = vunpack.c.l.b16 %v119
    %v413 = vunpack.c.l.b16 %v120
    %v414 = vunpack.c.l.b16 %v121
    %v415 = vunpack.c.l.b16 %v122
    %v416 = vunpack.c.l.b16 %v123
    %v417 = vunpack.c.l.b16 %v124
    %v418 = vunpack.c.l.b16 %v125
    %v419 = vunpack.c.l.b16 %v126
    %v420 = vunpack.c.l.b16 %v127
    %v421 = vunpack.c.l.b16 %v128
    %v422 = vunpack.c.l.b16 %v129
    %v423 = vunpack.c.l.b16 %v130
    %v424 = vunpack.c.l.b16 %v131
    %v425 = vunpack.c.l.b16 %v132
    %v426 = vunpack.c.l.b16 %v133
    %v427 = vunpack.c.l.b16 %v134
    %v428 = vunpack.c.l.b16 %v135
    %v429 = vunpack.c.l.b16 %v136
    %v430 = vunpack.c.l.b16 %v137
    %v431 = vunpack.c.l.b16 %v138
    %v432 = vunpack.c.l.b16 %v139
    %v433 = vunpack.c.l.b16 %v140
    %v434 = vunpack.c.l.b16 %v141
    %v435 = vunpack.c.l.b16 %v142
    %v436 = vunpack.c.l.b16 %v143
    %v437 = vunpack.c.l.b16 %v144
    %v438 = vunpack.c.l.b16 %v145
    %v439 = vunpack.c.l.b16 %v146
    %v440 = vunpack.c.l.b16 %v147
    %v441 = vunpack.c.l.b16 %v148
    %v442 = vunpack.c.l.b16 %v149
    %v443 = vunpack.c.l.b16 %v150
    %v444 = vunpack.c.l.b16 %v151
    %v445 = vunpack.c.l.b16 %v152
    %v446 = vunpack.c.l.b16 %v153
    %v447 = vunpack.c.l.b16 %v154
    %v448 = vunpack.c.l.b16 %v155
    %v449 = vunpack.c.l.b16 %v156
    %v450 = vunpack.c.l.b16 %v157
    %v451 = vunpack.c.l.b16 %v158
    %v452 = vunpack.c.l.b16 %v159
    %v453 = vunpack.c.l.b16 %v160
    %v454 = vunpack.c.l.b16 %v161
    %v455 = vunpack.c.l.b16 %v162
    %v456 = vunpack.c.l.b16 %v163
    %v457 = vunpack.c.l.b16 %v164
    %v458 = vunpack.c.l.b16 %v165
    %v459 = vunpack.c.l.b16 %v166
    %v460 = vunpack.c.l.b16 %v167
    %v461 = vunpack.c.l.b16 %v168
    %v462 = vunpack.c.l.b16 %v169
    %v463 = vunpack.c.l.b16 %v170
    %v464 = vunpack.c.l.b16 %v171
    %v465 = vunpack.c.l.b16 %v172
    %v466 = vunpack.c.l.b16 %v173
    %v467 = vunpack.c.l.b16 %v174
    %v468 = vunpack.c.l.b16 %v175
    %v469 = vunpack.c.l.b16 %v176
    %v470 = vunpack.c.l.b16 %v177
    %v471 = vunpack.c.l.b16 %v178
    %v472 = vunpack.c.l.b16 %v179
    %v473 = vunpack.c.l.b16 %v180
    %v474 = vunpack.c.l.b16 %v181
    %v475 = vunpack.c.l.b16 %v182
    %v476 = vpack.c.b16 %v381, %v380
    %v477 = vpack.c.b16 %v383, %v382
    %v478 = vpack.c.b16 %v385, %v384
    %v479 = vpack.c.b16 %v387, %v386
    %v480 = vpack.c.b16 %v389, %v388
    %v481 = vpack.c.b16 %v391, %v390
    %v482 = vpack.c.b16 %v393, %v392
    %v483 = vpack.c.b16 %v395, %v394
    %v484 = vpack.c.b16 %v397, %v396
    %v485 = vpack.c.b16 %v399, %v398
    %v486 = vpack.c.b16 %v401, %v400
    %v487 = vpack.c.b16 %v403, %v402
    %v488 = vpack.c.b16 %v405, %v404
    %v489 = vpack.c.b16 %v407, %v406
    %v490 = vpack.c.b16 %v409, %v408
    %v491 = vpack.c.b16 %v411, %v410
    %v492 = vpack.c.b16 %v413, %v412
    %v493 = vpack.c.b16 %v415, %v414
    %v494 = vpack.c.b16 %v417, %v416
    %v495 = vpack.c.b16 %v419, %v418
    %v496 = vpack.c.b16 %v421, %v420
    %v497 = vpack.c.b16 %v423, %v422
    %v498 = vpack.c.b16 %v425, %v424
    %v499 = vpack.c.b16 %v427, %v426
    %v500 = vpack.c.b16 %v429, %v428
    %v501 = vpack.c.b16 %v431, %v430
    %v502 = vpack.c.b16 %v433, %v432
    %v503 = vpack.c.b16 %v435, %v434
    %v504 = vpack.c.b16 %v437, %v436
    %v505 = vpack.c.b16 %v439, %v438
    %v506 = vpack.c.b16 %v441, %v440
    %v507 = vpack.c.b16 %v443, %v442
    %v508 = vpack.c.b16 %v445, %v444
    %v509 = vpack.c.b16 %v447, %v446
    %v510 = vpack.c.b16 %v449, %v448
    %v511 = vpack.c.b16 %v451, %v450
    %v512 = vpack.c.b16 %v453, %v452
    %v513 = vpack.c.b16 %v455, %v454
    %v514 = vpack.c.b16 %v457, %v456
    %v515 = vpack.c.b16 %v459, %v458
    %v516 = vpack.c.b16 %v461, %v460
    %v517 = vpack.c.b16 %v463, %v462
    %v518 = vpack.c.b16 %v465, %v464
    %v519 = vpack.c.b16 %v467, %v466
    %v520 = vpack.c.b16 %v469, %v468
    %v521 = vpack.c.b16 %v471, %v470
    %v522 = vpack.c.b16 %v473, %v472
    %v523 = vpack.c.b16 %v475, %v474
    %v572 = vcombine.low %v188, %v188
    %574 = vmatprep.subr.bf16.mxu0 0
    %575 = vmatpush1.bf16.msra.mxu0 %v476
    %576 = vmatprep.subr.bf16.mxu0 0
    %577 = vmatpush1.bf16.msra.mxu0 %v477
    %578 = vmatprep.subr.bf16.mxu0 0
    %579 = vmatpush1.bf16.msra.mxu0 %v478
    %580 = vmatprep.subr.bf16.mxu0 0
    %581 = vmatpush1.bf16.msra.mxu0 %v479
    %582 = vmatprep.subr.bf16.mxu0 0
    %583 = vmatpush1.bf16.msra.mxu0 %v480
    %584 = vmatprep.subr.bf16.mxu0 0
    %585 = vmatpush1.bf16.msra.mxu0 %v481
    %586 = vmatprep.subr.bf16.mxu0 0
    %587 = vmatpush1.bf16.msra.mxu0 %v482
    %588 = vmatprep.subr.bf16.mxu0 0
    %589 = vmatpush1.bf16.msra.mxu0 %v483
    %590 = vmatprep.subr.bf16.mxu0 0
    %591 = vmatpush1.bf16.msra.mxu0 %v484
    %592 = vmatprep.subr.bf16.mxu0 0
    %593 = vmatpush1.bf16.msra.mxu0 %v485
    %594 = vmatprep.subr.bf16.mxu0 0
    %595 = vmatpush1.bf16.msra.mxu0 %v486
    %596 = vmatprep.subr.bf16.mxu0 0
    %597 = vmatpush1.bf16.msra.mxu0 %v487
    %598 = vmatprep.subr.bf16.mxu0 0
    %599 = vmatpush1.bf16.msra.mxu0 %v488
    %600 = vmatprep.subr.bf16.mxu0 0
    %601 = vmatpush1.bf16.msra.mxu0 %v489
    %602 = vmatprep.subr.bf16.mxu0 0
    %603 = vmatpush1.bf16.msra.mxu0 %v490
    %604 = vmatprep.subr.bf16.mxu0 0
    %605 = vmatpush1.bf16.msra.mxu0 %v491
    %606 = vmatprep.mubr.bf16.mxu0 %v267
    %607 = vmatmul.mubr.bf16.gmra.mrb[0].mxu0 %v259
    %v608 = vpop.f32.mrb[0].mxu0
    %v609 = vadd.f32 %v572, %v608
    %v610 = vpop.f32.mrb[0].mxu0
    %v611 = vpop.f32.mrb[0].mxu0
    %v612 = vpop.f32.mrb[0].mxu0
    %613 = vdwg.mxu0
    %614 = vmatprep.subr.bf16.mxu0 0
    %615 = vmatpush1.bf16.msra.mxu0 %v492
    %616 = vmatprep.subr.bf16.mxu0 0
    %617 = vmatpush1.bf16.msra.mxu0 %v493
    %618 = vmatprep.subr.bf16.mxu0 0
    %619 = vmatpush1.bf16.msra.mxu0 %v494
    %620 = vmatprep.subr.bf16.mxu0 0
    %621 = vmatpush1.bf16.msra.mxu0 %v495
    %622 = vmatprep.subr.bf16.mxu0 0
    %623 = vmatpush1.bf16.msra.mxu0 %v496
    %624 = vmatprep.subr.bf16.mxu0 0
    %625 = vmatpush1.bf16.msra.mxu0 %v497
    %626 = vmatprep.subr.bf16.mxu0 0
    %627 = vmatpush1.bf16.msra.mxu0 %v498
    %628 = vmatprep.subr.bf16.mxu0 0
    %629 = vmatpush1.bf16.msra.mxu0 %v499
    %630 = vmatprep.subr.bf16.mxu0 0
    %631 = vmatpush1.bf16.msra.mxu0 %v500
    %632 = vmatprep.subr.bf16.mxu0 0
    %633 = vmatpush1.bf16.msra.mxu0 %v501
    %634 = vmatprep.subr.bf16.mxu0 0
    %635 = vmatpush1.bf16.msra.mxu0 %v502
    %636 = vmatprep.subr.bf16.mxu0 0
    %637 = vmatpush1.bf16.msra.mxu0 %v503
    %638 = vmatprep.subr.bf16.mxu0 0
    %639 = vmatpush1.bf16.msra.mxu0 %v504
    %640 = vmatprep.subr.bf16.mxu0 0
    %641 = vmatpush1.bf16.msra.mxu0 %v505
    %642 = vmatprep.subr.bf16.mxu0 0
    %643 = vmatpush1.bf16.msra.mxu0 %v506
    %644 = vmatprep.subr.bf16.mxu0 0
    %645 = vmatpush1.bf16.msra.mxu0 %v507
    %646 = vmatprep.mubr.bf16.mxu0 %v268
    %647 = vmatmul.mubr.bf16.gmra.mrb[0].mxu0 %v266
    %v648 = vpop.f32.mrb[0].mxu0
    %v649 = vadd.f32 %v609, %v648
    %v650 = vpop.f32.mrb[0].mxu0
    %v651 = vpop.f32.mrb[0].mxu0
    %v652 = vpop.f32.mrb[0].mxu0
    %653 = vdwg.mxu0
    %654 = vmatprep.subr.bf16.mxu0 0
    %655 = vmatpush1.bf16.msra.mxu0 %v508
    %656 = vmatprep.subr.bf16.mxu0 0
    %657 = vmatpush1.bf16.msra.mxu0 %v509
    %658 = vmatprep.subr.bf16.mxu0 0
    %659 = vmatpush1.bf16.msra.mxu0 %v510
    %660 = vmatprep.subr.bf16.mxu0 0
    %661 = vmatpush1.bf16.msra.mxu0 %v511
    %662 = vmatprep.subr.bf16.mxu0 0
    %663 = vmatpush1.bf16.msra.mxu0 %v512
    %664 = vmatprep.subr.bf16.mxu0 0
    %665 = vmatpush1.bf16.msra.mxu0 %v513
    %666 = vmatprep.subr.bf16.mxu0 0
    %667 = vmatpush1.bf16.msra.mxu0 %v514
    %668 = vmatprep.subr.bf16.mxu0 0
    %669 = vmatpush1.bf16.msra.mxu0 %v515
    %670 = vmatprep.subr.bf16.mxu0 0
    %671 = vmatpush1.bf16.msra.mxu0 %v516
    %672 = vmatprep.subr.bf16.mxu0 0
    %673 = vmatpush1.bf16.msra.mxu0 %v517
    %674 = vmatprep.subr.bf16.mxu0 0
    %675 = vmatpush1.bf16.msra.mxu0 %v518
    %676 = vmatprep.subr.bf16.mxu0 0
    %677 = vmatpush1.bf16.msra.mxu0 %v519
    %678 = vmatprep.subr.bf16.mxu0 0
    %679 = vmatpush1.bf16.msra.mxu0 %v520
    %680 = vmatprep.subr.bf16.mxu0 0
    %681 = vmatpush1.bf16.msra.mxu0 %v521
    %682 = vmatprep.subr.bf16.mxu0 0
    %683 = vmatpush1.bf16.msra.mxu0 %v522
    %684 = vmatprep.subr.bf16.mxu0 0
    %685 = vmatpush1.bf16.msra.mxu0 %v523
    %686 = vmatprep.mubr.bf16.mxu0 %v277
    %687 = vmatmul.mubr.bf16.gmra.mrb[0].mxu0 %v276
    %v688 = vpop.f32.mrb[0].mxu0
    %v689 = vadd.f32 %v649, %v688
    %v690 = vpop.f32.mrb[0].mxu0
    %v691 = vpop.f32.mrb[0].mxu0
    %v692 = vpop.f32.mrb[0].mxu0
    %693 = vdwg.mxu0
    %v695 = vcombine.high %v689, %v689
    %v697 = vld [vmem:[%s4] sm:$0xf]
    %v698 = vadd.f32 %v689, %v697
    %v699 = vadd.f32 %v695, %v697
    %vm700 = vcmask 257024
    %701 = vst.msk [vmem:[#allocation2] sm:$0xf] %vm700, %v698
    %702 = vst.msk [vmem:[#allocation2 + $0x4] sm:$0xf] %vm700, %v699
    %v703 = vld [vmem:[%s1] sm:$0xf]
    %v704 = vld [vmem:[%s1 + $0x4] sm:$0xf]
    %v705 = vpack.c.bf16 %v703, %v703
    %v706 = vpack.c.bf16 %v704, %v704
    %v707 = vld [vmem:[%s7] sm:$0xf]
    %v708 = vld [vmem:[%s7 + $0x4] sm:$0xf]
    %v709 = vld [vmem:[%s7 + $0x8] sm:$0xf]
    %v710 = vld [vmem:[%s7 + $0xc] sm:$0xf]
    %v711 = vld [vmem:[%s7 + $0x10] sm:$0xf]
    %v712 = vld [vmem:[%s7 + $0x14] sm:$0xf]
    %v713 = vld [vmem:[%s7 + $0x18] sm:$0xf]
    %v714 = vld [vmem:[%s7 + $0x1c] sm:$0xf]
    %v715 = vld [vmem:[%s8] sm:$0x1]
    %v717 = vlaneseq
    %v718 = vshrl.u32 %v717, 7
    %v719 = vsub.s32 0, %v718
    %v720 = vrot.slane %v715, %v719
    %v723 = vcombine.low %v705, %v706
    %v725 = vunpack.c.l.s4 1983009808
    %v726 = vunpack.c.0.s8 %v725
    %v727 = vlaneseq
    %v728 = vshrl.u32 %v727, 7
    %v729 = vsub.s32 %v726, %v728
    %v730 = vrot.slane %v723, %v729
    %v739 = vunpack.c.l.b16 %v707
    %v740 = vunpack.c.l.b16 %v708
    %v741 = vunpack.c.l.b16 %v709
    %v742 = vunpack.c.l.b16 %v710
    %v743 = vunpack.c.l.b16 %v711
    %v744 = vunpack.c.l.b16 %v712
    %v745 = vunpack.c.l.b16 %v713
    %v746 = vunpack.c.l.b16 %v714
    %v747 = vpack.c.b16 %v740, %v739
    %v748 = vpack.c.b16 %v742, %v741
    %v749 = vpack.c.b16 %v744, %v743
    %v750 = vpack.c.b16 %v746, %v745
    %v755 = vcombine.low %v720, %v720
    %vm757 = vcmask 523264
    %v759 = vsel %vm757, %v730, 0
    %761 = vmatprep.subr.bf16.mxu0 0
    %762 = vmatpush1.bf16.msra.mxu0 %v747
    %763 = vmatprep.subr.bf16.mxu0 0
    %764 = vmatpush1.bf16.msra.mxu0 %v748
    %765 = vmatprep.subr.bf16.mxu0 0
    %766 = vmatpush1.bf16.msra.mxu0 %v749
    %767 = vmatprep.subr.bf16.mxu0 0
    %768 = vmatpush1.bf16.msra.mxu0 %v750
    %769 = vmatprep.subr.bf16.mxu0 0
    %770 = vmatpush1.bf16.msra.mxu0 0
    %771 = vmatprep.subr.bf16.mxu0 0
    %772 = vmatpush1.bf16.msra.mxu0 0
    %773 = vmatprep.subr.bf16.mxu0 0
    %774 = vmatpush1.bf16.msra.mxu0 0
    %775 = vmatprep.subr.bf16.mxu0 0
    %776 = vmatpush1.bf16.msra.mxu0 0
    %777 = vmatprep.subr.bf16.mxu0 0
    %778 = vmatpush1.bf16.msra.mxu0 0
    %779 = vmatprep.subr.bf16.mxu0 0
    %780 = vmatpush1.bf16.msra.mxu0 0
    %781 = vmatprep.subr.bf16.mxu0 0
    %782 = vmatpush1.bf16.msra.mxu0 0
    %783 = vmatprep.subr.bf16.mxu0 0
    %784 = vmatpush1.bf16.msra.mxu0 0
    %785 = vmatprep.subr.bf16.mxu0 0
    %786 = vmatpush1.bf16.msra.mxu0 0
    %787 = vmatprep.subr.bf16.mxu0 0
    %788 = vmatpush1.bf16.msra.mxu0 0
    %789 = vmatprep.subr.bf16.mxu0 0
    %790 = vmatpush1.bf16.msra.mxu0 0
    %791 = vmatprep.subr.bf16.mxu0 0
    %792 = vmatpush1.bf16.msra.mxu0 0
    %793 = vmatprep.mubr.bf16.mxu0 0
    %794 = vmatmul.mubr.bf16.gmra.mrb[0].mxu0 %v759
    %v795 = vpop.f32.mrb[0].mxu0
    %v796 = vadd.f32 %v755, %v795
    %v797 = vpop.f32.mrb[0].mxu0
    %v798 = vpop.f32.mrb[0].mxu0
    %v799 = vpop.f32.mrb[0].mxu0
    %800 = vdwg.mxu0
    %v802 = vcombine.high %v796, %v796
    %804 = vst.msk [vmem:[#allocation4] sm:$0xf] %vm700, %v796
    %805 = vst.msk [vmem:[#allocation4 + $0x4] sm:$0xf] %vm700, %v802
    %v806 = vld [vmem:[%s2] sm:$0x7]
    %v807 = vld [vmem:[%s2 + $0x4] sm:$0x7]
    %v808 = vpack.c.bf16 %v806, %v806
    %v809 = vpack.c.bf16 %v807, %v807
    %v810 = vld [vmem:[%s9] sm:$0xf]
    %v811 = vld [vmem:[%s9 + $0x4] sm:$0xf]
    %v812 = vld [vmem:[%s9 + $0x8] sm:$0xf]
    %v813 = vld [vmem:[%s9 + $0xc] sm:$0xf]
    %v814 = vld [vmem:[%s10] sm:$0x1]
    %v816 = vlaneseq
    %v817 = vshrl.u32 %v816, 7
    %v818 = vsub.s32 0, %v817
    %v819 = vrot.slane %v814, %v818
    %v823 = vunpack.c.l.s4 1966171168
    %v824 = vunpack.c.0.s8 %v823
    %v825 = vlaneseq
    %v826 = vshrl.u32 %v825, 7
    %v827 = vsub.s32 %v824, %v826
    %v828 = vrot.slane %v808, %v827
    %v829 = vcombine.high %v828, %v828
    %v831 = vunpack.c.l.s4 1966171168
    %v832 = vunpack.c.0.s8 %v831
    %v833 = vlaneseq
    %v834 = vshrl.u32 %v833, 7
    %v835 = vsub.s32 %v832, %v834
    %v836 = vrot.slane %v828, %v835
    %v838 = vunpack.c.l.s4 1966171168
    %v839 = vunpack.c.0.s8 %v838
    %v840 = vlaneseq
    %v841 = vshrl.u32 %v840, 7
    %v842 = vsub.s32 %v839, %v841
    %v843 = vrot.slane %v829, %v842
    %v845 = vunpack.c.l.s4 1966171168
    %v846 = vunpack.c.0.s8 %v845
    %v847 = vlaneseq
    %v848 = vshrl.u32 %v847, 7
    %v849 = vsub.s32 %v846, %v848
    %v850 = vrot.slane %v809, %v849
    %v851 = vcombine.high %v850, %v850
    %v853 = vunpack.c.l.s4 1966171168
    %v854 = vunpack.c.0.s8 %v853
    %v855 = vlaneseq
    %v856 = vshrl.u32 %v855, 7
    %v857 = vsub.s32 %v854, %v856
    %v858 = vrot.slane %v850, %v857
    %v860 = vunpack.c.l.s4 1966171168
    %v861 = vunpack.c.0.s8 %v860
    %v862 = vlaneseq
    %v863 = vshrl.u32 %v862, 7
    %v864 = vsub.s32 %v861, %v863
    %v865 = vrot.slane %v851, %v864
    %v866 = vunpack.i.l.s16 %v836
    %v867 = vunpack.i.h.s16 %v836
    %v868 = vunpack.i.l.s16 %v843
    %v869 = vunpack.i.l.s16 %v858
    %v870 = vunpack.i.h.s16 %v858
    %v871 = vunpack.i.l.s16 %v865
    %v873 = vunpack.c.l.s4 1966171168
    %v874 = vunpack.c.0.s8 %v873
    %v875 = vlaneseq
    %v876 = vshrl.u32 %v875, 7
    %v877 = vsub.s32 %v874, %v876
    %v878 = vrot.slane %v819, %v877
    %v879 = vcombine.high %v878, %v878
    %v881 = vunpack.c.l.s4 1966171168
    %v882 = vunpack.c.0.s8 %v881
    %v883 = vlaneseq
    %v884 = vshrl.u32 %v883, 7
    %v885 = vsub.s32 %v882, %v884
    %v886 = vrot.slane %v878, %v885
    %v888 = vunpack.c.l.s4 1966171168
    %v889 = vunpack.c.0.s8 %v888
    %v890 = vlaneseq
    %v891 = vshrl.u32 %v890, 7
    %v892 = vsub.s32 %v889, %v891
    %v893 = vrot.slane %v879, %v892
    %v894 = vcombine.high %v886, %v886
    %v895 = vpack.i.b16 %v867, %v866
    %v896 = vpack.i.b16 %v869, %v868
    %v897 = vpack.i.b16 %v871, %v870
    %v898 = vcombine.low %v895, %v896
    %v900 = vunpack.c.l.s4 1966171168
    %v901 = vunpack.c.0.s8 %v900
    %v902 = vlaneseq
    %v903 = vshrl.u32 %v902, 7
    %v904 = vsub.s32 %v901, %v903
    %v905 = vrot.slane %v898, %v904
    %v907 = vunpack.c.l.s4 1966171168
    %v908 = vunpack.c.0.s8 %v907
    %v909 = vlaneseq
    %v910 = vshrl.u32 %v909, 7
    %v911 = vsub.s32 %v908, %v910
    %v912 = vrot.slane %v897, %v911
    %v913 = vcombine.low %v905, %v912
    %v915 = vunpack.c.l.s4 1966171168
    %v916 = vunpack.c.0.s8 %v915
    %v917 = vlaneseq
    %v918 = vshrl.u32 %v917, 7
    %v919 = vsub.s32 %v916, %v918
    %v920 = vrot.slane %v913, %v919
    %v925 = vunpack.c.l.b16 %v810
    %v926 = vunpack.c.l.b16 %v811
    %v927 = vunpack.c.l.b16 %v812
    %v928 = vunpack.c.l.b16 %v813
    %v929 = vpack.c.b16 %v926, %v925
    %v930 = vpack.c.b16 %v928, %v927
    %v933 = vcombine.low %v886, %v893
    %v934 = vcombine.low %v894, %v886
    %v935 = vcombine.low %v893, %v894
    %v937 = vunpack.c.l.s4 1966171168
    %v938 = vunpack.c.0.s8 %v937
    %v939 = vlaneseq
    %v940 = vshrl.u32 %v939, 7
    %v941 = vsub.s32 %v938, %v940
    %v942 = vrot.slane %v933, %v941
    %v944 = vunpack.c.l.s4 1966171168
    %v945 = vunpack.c.0.s8 %v944
    %v946 = vlaneseq
    %v947 = vshrl.u32 %v946, 7
    %v948 = vsub.s32 %v945, %v947
    %v949 = vrot.slane %v934, %v948
    %v951 = vunpack.c.l.s4 1966171168
    %v952 = vunpack.c.0.s8 %v951
    %v953 = vlaneseq
    %v954 = vshrl.u32 %v953, 7
    %v955 = vsub.s32 %v952, %v954
    %v956 = vrot.slane %v935, %v955
    %v957 = vcombine.low %v942, %v949
    %v959 = vunpack.c.l.s4 1966171168
    %v960 = vunpack.c.0.s8 %v959
    %v961 = vlaneseq
    %v962 = vshrl.u32 %v961, 7
    %v963 = vsub.s32 %v960, %v962
    %v964 = vrot.slane %v957, %v963
    %v966 = vunpack.c.l.s4 1966171168
    %v967 = vunpack.c.0.s8 %v966
    %v968 = vlaneseq
    %v969 = vshrl.u32 %v968, 7
    %v970 = vsub.s32 %v967, %v969
    %v971 = vrot.slane %v956, %v970
    %v972 = vcombine.low %v964, %v971
    %vm974 = vcmask 261120
    %v976 = vsel %vm974, %v920, 0
    %978 = vmatprep.subr.bf16.mxu0 0
    %979 = vmatpush1.bf16.msra.mxu0 %v929
    %980 = vmatprep.subr.bf16.mxu0 0
    %981 = vmatpush1.bf16.msra.mxu0 %v930
    %982 = vmatprep.subr.bf16.mxu0 0
    %983 = vmatpush1.bf16.msra.mxu0 0
    %984 = vmatprep.subr.bf16.mxu0 0
    %985 = vmatpush1.bf16.msra.mxu0 0
    %986 = vmatprep.subr.bf16.mxu0 0
    %987 = vmatpush1.bf16.msra.mxu0 0
    %988 = vmatprep.subr.bf16.mxu0 0
    %989 = vmatpush1.bf16.msra.mxu0 0
    %990 = vmatprep.subr.bf16.mxu0 0
    %991 = vmatpush1.bf16.msra.mxu0 0
    %992 = vmatprep.subr.bf16.mxu0 0
    %993 = vmatpush1.bf16.msra.mxu0 0
    %994 = vmatprep.subr.bf16.mxu0 0
    %995 = vmatpush1.bf16.msra.mxu0 0
    %996 = vmatprep.subr.bf16.mxu0 0
    %997 = vmatpush1.bf16.msra.mxu0 0
    %998 = vmatprep.subr.bf16.mxu0 0
    %999 = vmatpush1.bf16.msra.mxu0 0
    %1000 = vmatprep.subr.bf16.mxu0 0
    %1001 = vmatpush1.bf16.msra.mxu0 0
    %1002 = vmatprep.subr.bf16.mxu0 0
    %1003 = vmatpush1.bf16.msra.mxu0 0
    %1004 = vmatprep.subr.bf16.mxu0 0
    %1005 = vmatpush1.bf16.msra.mxu0 0
    %1006 = vmatprep.subr.bf16.mxu0 0
    %1007 = vmatpush1.bf16.msra.mxu0 0
    %1008 = vmatprep.subr.bf16.mxu0 0
    %1009 = vmatpush1.bf16.msra.mxu0 0
    %1010 = vmatprep.mubr.bf16.mxu0 0
    %1011 = vmatmul.mubr.bf16.gmra.mrb[0].mxu0 %v976
    %v1012 = vpop.f32.mrb[0].mxu0
    %v1013 = vadd.f32 %v972, %v1012
    %v1014 = vpop.f32.mrb[0].mxu0
    %v1015 = vpop.f32.mrb[0].mxu0
    %v1016 = vpop.f32.mrb[0].mxu0
    %1017 = vdwg.mxu0
    %v1019 = vcombine.high %v1013, %v1013
    %v1021 = vunpack.c.l.s4 1966171168
    %v1022 = vunpack.c.0.s8 %v1021
    %v1023 = vlaneseq
    %v1024 = vshrl.u32 %v1023, 7
    %v1025 = vsub.s32 %v1022, %v1024
    %v1026 = vrot.slane %v1013, %v1025
    %v1028 = vunpack.c.l.s4 1966171168
    %v1029 = vunpack.c.0.s8 %v1028
    %v1030 = vlaneseq
    %v1031 = vshrl.u32 %v1030, 7
    %v1032 = vsub.s32 %v1029, %v1031
    %v1033 = vrot.slane %v1019, %v1032
    %v1034 = vcombine.high %v1026, %v1026
    %v1035 = vcombine.high %v1033, %v1033
    %v1037 = vunpack.c.l.s4 1966171168
    %v1038 = vunpack.c.0.s8 %v1037
    %v1039 = vlaneseq
    %v1040 = vshrl.u32 %v1039, 7
    %v1041 = vsub.s32 %v1038, %v1040
    %v1042 = vrot.slane %v1026, %v1041
    %v1044 = vunpack.c.l.s4 1966171168
    %v1045 = vunpack.c.0.s8 %v1044
    %v1046 = vlaneseq
    %v1047 = vshrl.u32 %v1046, 7
    %v1048 = vsub.s32 %v1045, %v1047
    %v1049 = vrot.slane %v1033, %v1048
    %v1051 = vunpack.c.l.s4 1966171168
    %v1052 = vunpack.c.0.s8 %v1051
    %v1053 = vlaneseq
    %v1054 = vshrl.u32 %v1053, 7
    %v1055 = vsub.s32 %v1052, %v1054
    %v1056 = vrot.slane %v1034, %v1055
    %v1058 = vunpack.c.l.s4 1966171168
    %v1059 = vunpack.c.0.s8 %v1058
    %v1060 = vlaneseq
    %v1061 = vshrl.u32 %v1060, 7
    %v1062 = vsub.s32 %v1059, %v1061
    %v1063 = vrot.slane %v1035, %v1062
    %v1064 = vcombine.high %v1042, %v1042
    %v1065 = vcombine.high %v1056, %v1056
    %v1066 = vcombine.low %v1042, %v1056
    %v1068 = vunpack.c.l.s4 1966171168
    %v1069 = vunpack.c.0.s8 %v1068
    %v1070 = vlaneseq
    %v1071 = vshrl.u32 %v1070, 7
    %v1072 = vsub.s32 %v1069, %v1071
    %v1073 = vrot.slane %v1066, %v1072
    %v1075 = vunpack.c.l.s4 1966171168
    %v1076 = vunpack.c.0.s8 %v1075
    %v1077 = vlaneseq
    %v1078 = vshrl.u32 %v1077, 7
    %v1079 = vsub.s32 %v1076, %v1078
    %v1080 = vrot.slane %v1064, %v1079
    %v1081 = vcombine.low %v1073, %v1080
    %v1083 = vunpack.c.l.s4 1966171168
    %v1084 = vunpack.c.0.s8 %v1083
    %v1085 = vlaneseq
    %v1086 = vshrl.u32 %v1085, 7
    %v1087 = vsub.s32 %v1084, %v1086
    %v1088 = vrot.slane %v1081, %v1087
    %v1089 = vcombine.low %v1065, %v1049
    %v1091 = vunpack.c.l.s4 1966171168
    %v1092 = vunpack.c.0.s8 %v1091
    %v1093 = vlaneseq
    %v1094 = vshrl.u32 %v1093, 7
    %v1095 = vsub.s32 %v1092, %v1094
    %v1096 = vrot.slane %v1089, %v1095
    %v1098 = vunpack.c.l.s4 1966171168
    %v1099 = vunpack.c.0.s8 %v1098
    %v1100 = vlaneseq
    %v1101 = vshrl.u32 %v1100, 7
    %v1102 = vsub.s32 %v1099, %v1101
    %v1103 = vrot.slane %v1063, %v1102
    %v1104 = vcombine.low %v1096, %v1103
    %v1106 = vunpack.c.l.s4 1966171168
    %v1107 = vunpack.c.0.s8 %v1106
    %v1108 = vlaneseq
    %v1109 = vshrl.u32 %v1108, 7
    %v1110 = vsub.s32 %v1107, %v1109
    %v1111 = vrot.slane %v1104, %v1110
    %vm1114 = vcmask 256000
    %1115 = vst.msk [vmem:[%s13] sm:$0x7] %vm1114, %v1088
    %1116 = vst.msk [vmem:[%s13 + $0x4] sm:$0x7] %vm1114, %v1111
    %v1117 = vld [vmem:[%s3] sm:$0x7]
    %v1118 = vld [vmem:[%s3 + $0x4] sm:$0x7]
    %v1119 = vpack.c.bf16 %v1117, %v1117
    %v1120 = vpack.c.bf16 %v1118, %v1118
    %v1121 = vld [vmem:[%s11] sm:$0x1]
    %v1122 = vld [vmem:[%s12] sm:$0x1]
    %v1124 = vlaneseq
    %v1125 = vshrl.u32 %v1124, 7
    %v1126 = vsub.s32 0, %v1125
    %v1127 = vrot.slane %v1122, %v1126
    %v1131 = vunpack.c.l.s4 1966171168
    %v1132 = vunpack.c.0.s8 %v1131
    %v1133 = vlaneseq
    %v1134 = vshrl.u32 %v1133, 7
    %v1135 = vsub.s32 %v1132, %v1134
    %v1136 = vrot.slane %v1119, %v1135
    %v1137 = vcombine.high %v1136, %v1136
    %v1139 = vunpack.c.l.s4 1966171168
    %v1140 = vunpack.c.0.s8 %v1139
    %v1141 = vlaneseq
    %v1142 = vshrl.u32 %v1141, 7
    %v1143 = vsub.s32 %v1140, %v1142
    %v1144 = vrot.slane %v1136, %v1143
    %v1146 = vunpack.c.l.s4 1966171168
    %v1147 = vunpack.c.0.s8 %v1146
    %v1148 = vlaneseq
    %v1149 = vshrl.u32 %v1148, 7
    %v1150 = vsub.s32 %v1147, %v1149
    %v1151 = vrot.slane %v1137, %v1150
    %v1153 = vunpack.c.l.s4 1966171168
    %v1154 = vunpack.c.0.s8 %v1153
    %v1155 = vlaneseq
    %v1156 = vshrl.u32 %v1155, 7
    %v1157 = vsub.s32 %v1154, %v1156
    %v1158 = vrot.slane %v1120, %v1157
    %v1159 = vcombine.high %v1158, %v1158
    %v1161 = vunpack.c.l.s4 1966171168
    %v1162 = vunpack.c.0.s8 %v1161
    %v1163 = vlaneseq
    %v1164 = vshrl.u32 %v1163, 7
    %v1165 = vsub.s32 %v1162, %v1164
    %v1166 = vrot.slane %v1158, %v1165
    %v1168 = vunpack.c.l.s4 1966171168
    %v1169 = vunpack.c.0.s8 %v1168
    %v1170 = vlaneseq
    %v1171 = vshrl.u32 %v1170, 7
    %v1172 = vsub.s32 %v1169, %v1171
    %v1173 = vrot.slane %v1159, %v1172
    %v1174 = vunpack.i.l.s16 %v1144
    %v1175 = vunpack.i.h.s16 %v1144
    %v1176 = vunpack.i.l.s16 %v1151
    %v1177 = vunpack.i.l.s16 %v1166
    %v1178 = vunpack.i.h.s16 %v1166
    %v1179 = vunpack.i.l.s16 %v1173
    %v1181 = vunpack.c.l.s4 1966171168
    %v1182 = vunpack.c.0.s8 %v1181
    %v1183 = vlaneseq
    %v1184 = vshrl.u32 %v1183, 7
    %v1185 = vsub.s32 %v1182, %v1184
    %v1186 = vrot.slane %v1127, %v1185
    %v1187 = vcombine.high %v1186, %v1186
    %v1189 = vunpack.c.l.s4 1966171168
    %v1190 = vunpack.c.0.s8 %v1189
    %v1191 = vlaneseq
    %v1192 = vshrl.u32 %v1191, 7
    %v1193 = vsub.s32 %v1190, %v1192
    %v1194 = vrot.slane %v1186, %v1193
    %v1196 = vunpack.c.l.s4 1966171168
    %v1197 = vunpack.c.0.s8 %v1196
    %v1198 = vlaneseq
    %v1199 = vshrl.u32 %v1198, 7
    %v1200 = vsub.s32 %v1197, %v1199
    %v1201 = vrot.slane %v1187, %v1200
    %v1202 = vcombine.high %v1194, %v1194
    %v1203 = vpack.i.b16 %v1175, %v1174
    %v1204 = vpack.i.b16 %v1177, %v1176
    %v1205 = vpack.i.b16 %v1179, %v1178
    %v1206 = vcombine.low %v1203, %v1204
    %v1208 = vunpack.c.l.s4 1966171168
    %v1209 = vunpack.c.0.s8 %v1208
    %v1210 = vlaneseq
    %v1211 = vshrl.u32 %v1210, 7
    %v1212 = vsub.s32 %v1209, %v1211
    %v1213 = vrot.slane %v1206, %v1212
    %v1215 = vunpack.c.l.s4 1966171168
    %v1216 = vunpack.c.0.s8 %v1215
    %v1217 = vlaneseq
    %v1218 = vshrl.u32 %v1217, 7
    %v1219 = vsub.s32 %v1216, %v1218
    %v1220 = vrot.slane %v1205, %v1219
    %v1221 = vcombine.low %v1213, %v1220
    %v1223 = vunpack.c.l.s4 1966171168
    %v1224 = vunpack.c.0.s8 %v1223
    %v1225 = vlaneseq
    %v1226 = vshrl.u32 %v1225, 7
    %v1227 = vsub.s32 %v1224, %v1226
    %v1228 = vrot.slane %v1221, %v1227
    %v1229 = vcombine.low %v1194, %v1201
    %v1230 = vcombine.low %v1202, %v1194
    %v1231 = vcombine.low %v1201, %v1202
    %v1233 = vunpack.c.l.s4 1966171168
    %v1234 = vunpack.c.0.s8 %v1233
    %v1235 = vlaneseq
    %v1236 = vshrl.u32 %v1235, 7
    %v1237 = vsub.s32 %v1234, %v1236
    %v1238 = vrot.slane %v1229, %v1237
    %v1240 = vunpack.c.l.s4 1966171168
    %v1241 = vunpack.c.0.s8 %v1240
    %v1242 = vlaneseq
    %v1243 = vshrl.u32 %v1242, 7
    %v1244 = vsub.s32 %v1241, %v1243
    %v1245 = vrot.slane %v1230, %v1244
    %v1247 = vunpack.c.l.s4 1966171168
    %v1248 = vunpack.c.0.s8 %v1247
    %v1249 = vlaneseq
    %v1250 = vshrl.u32 %v1249, 7
    %v1251 = vsub.s32 %v1248, %v1250
    %v1252 = vrot.slane %v1231, %v1251
    %v1253 = vcombine.low %v1238, %v1245
    %v1255 = vunpack.c.l.s4 1966171168
    %v1256 = vunpack.c.0.s8 %v1255
    %v1257 = vlaneseq
    %v1258 = vshrl.u32 %v1257, 7
    %v1259 = vsub.s32 %v1256, %v1258
    %v1260 = vrot.slane %v1253, %v1259
    %v1262 = vunpack.c.l.s4 1966171168
    %v1263 = vunpack.c.0.s8 %v1262
    %v1264 = vlaneseq
    %v1265 = vshrl.u32 %v1264, 7
    %v1266 = vsub.s32 %v1263, %v1265
    %v1267 = vrot.slane %v1252, %v1266
    %v1268 = vcombine.low %v1260, %v1267
    %vm1270 = vcmask 15360
    %v1272 = vsel %vm1270, %v1228, 0
    %vm1274 = vcmask 1040384
    %v1276 = vsel %vm1274, %v1121, 0
    %1278 = vmatprep.subr.bf16.mxu0 0
    %1279 = vmatpush1.bf16.msra.mxu0 %v1276
    %1280 = vmatprep.subr.bf16.mxu0 0
    %1281 = vmatpush1.bf16.msra.mxu0 0
    %1282 = vmatprep.subr.bf16.mxu0 0
    %1283 = vmatpush1.bf16.msra.mxu0 0
    %1284 = vmatprep.subr.bf16.mxu0 0
    %1285 = vmatpush1.bf16.msra.mxu0 0
    %1286 = vmatprep.subr.bf16.mxu0 0
    %1287 = vmatpush1.bf16.msra.mxu0 0
    %1288 = vmatprep.subr.bf16.mxu0 0
    %1289 = vmatpush1.bf16.msra.mxu0 0
    %1290 = vmatprep.subr.bf16.mxu0 0
    %1291 = vmatpush1.bf16.msra.mxu0 0
    %1292 = vmatprep.subr.bf16.mxu0 0
    %1293 = vmatpush1.bf16.msra.mxu0 0
    %1294 = vmatprep.subr.bf16.mxu0 0
    %1295 = vmatpush1.bf16.msra.mxu0 0
    %1296 = vmatprep.subr.bf16.mxu0 0
    %1297 = vmatpush1.bf16.msra.mxu0 0
    %1298 = vmatprep.subr.bf16.mxu0 0
    %1299 = vmatpush1.bf16.msra.mxu0 0
    %1300 = vmatprep.subr.bf16.mxu0 0
    %1301 = vmatpush1.bf16.msra.mxu0 0
    %1302 = vmatprep.subr.bf16.mxu0 0
    %1303 = vmatpush1.bf16.msra.mxu0 0
    %1304 = vmatprep.subr.bf16.mxu0 0
    %1305 = vmatpush1.bf16.msra.mxu0 0
    %1306 = vmatprep.subr.bf16.mxu0 0
    %1307 = vmatpush1.bf16.msra.mxu0 0
    %1308 = vmatprep.subr.bf16.mxu0 0
    %1309 = vmatpush1.bf16.msra.mxu0 0
    %1310 = vmatprep.mubr.bf16.mxu0 0
    %1311 = vmatmul.mubr.bf16.gmra.mrb[0].mxu0 %v1272
    %v1312 = vpop.f32.mrb[0].mxu0
    %v1313 = vadd.f32 %v1268, %v1312
    %v1314 = vpop.f32.mrb[0].mxu0
    %v1315 = vpop.f32.mrb[0].mxu0
    %v1316 = vpop.f32.mrb[0].mxu0
    %1317 = vdwg.mxu0
    %v1319 = vcombine.high %v1313, %v1313
    %v1321 = vunpack.c.l.s4 1966171168
    %v1322 = vunpack.c.0.s8 %v1321
    %v1323 = vlaneseq
    %v1324 = vshrl.u32 %v1323, 7
    %v1325 = vsub.s32 %v1322, %v1324
    %v1326 = vrot.slane %v1313, %v1325
    %v1328 = vunpack.c.l.s4 1966171168
    %v1329 = vunpack.c.0.s8 %v1328
    %v1330 = vlaneseq
    %v1331 = vshrl.u32 %v1330, 7
    %v1332 = vsub.s32 %v1329, %v1331
    %v1333 = vrot.slane %v1319, %v1332
    %v1334 = vcombine.high %v1326, %v1326
    %v1335 = vcombine.high %v1333, %v1333
    %v1337 = vunpack.c.l.s4 1966171168
    %v1338 = vunpack.c.0.s8 %v1337
    %v1339 = vlaneseq
    %v1340 = vshrl.u32 %v1339, 7
    %v1341 = vsub.s32 %v1338, %v1340
    %v1342 = vrot.slane %v1326, %v1341
    %v1344 = vunpack.c.l.s4 1966171168
    %v1345 = vunpack.c.0.s8 %v1344
    %v1346 = vlaneseq
    %v1347 = vshrl.u32 %v1346, 7
    %v1348 = vsub.s32 %v1345, %v1347
    %v1349 = vrot.slane %v1333, %v1348
    %v1351 = vunpack.c.l.s4 1966171168
    %v1352 = vunpack.c.0.s8 %v1351
    %v1353 = vlaneseq
    %v1354 = vshrl.u32 %v1353, 7
    %v1355 = vsub.s32 %v1352, %v1354
    %v1356 = vrot.slane %v1334, %v1355
    %v1358 = vunpack.c.l.s4 1966171168
    %v1359 = vunpack.c.0.s8 %v1358
    %v1360 = vlaneseq
    %v1361 = vshrl.u32 %v1360, 7
    %v1362 = vsub.s32 %v1359, %v1361
    %v1363 = vrot.slane %v1335, %v1362
    %v1364 = vcombine.high %v1342, %v1342
    %v1365 = vcombine.high %v1356, %v1356
    %v1366 = vcombine.low %v1342, %v1356
    %v1368 = vunpack.c.l.s4 1966171168
    %v1369 = vunpack.c.0.s8 %v1368
    %v1370 = vlaneseq
    %v1371 = vshrl.u32 %v1370, 7
    %v1372 = vsub.s32 %v1369, %v1371
    %v1373 = vrot.slane %v1366, %v1372
    %v1375 = vunpack.c.l.s4 1966171168
    %v1376 = vunpack.c.0.s8 %v1375
    %v1377 = vlaneseq
    %v1378 = vshrl.u32 %v1377, 7
    %v1379 = vsub.s32 %v1376, %v1378
    %v1380 = vrot.slane %v1364, %v1379
    %v1381 = vcombine.low %v1373, %v1380
    %v1383 = vunpack.c.l.s4 1966171168
    %v1384 = vunpack.c.0.s8 %v1383
    %v1385 = vlaneseq
    %v1386 = vshrl.u32 %v1385, 7
    %v1387 = vsub.s32 %v1384, %v1386
    %v1388 = vrot.slane %v1381, %v1387
    %v1389 = vcombine.low %v1365, %v1349
    %v1391 = vunpack.c.l.s4 1966171168
    %v1392 = vunpack.c.0.s8 %v1391
    %v1393 = vlaneseq
    %v1394 = vshrl.u32 %v1393, 7
    %v1395 = vsub.s32 %v1392, %v1394
    %v1396 = vrot.slane %v1389, %v1395
    %v1398 = vunpack.c.l.s4 1966171168
    %v1399 = vunpack.c.0.s8 %v1398
    %v1400 = vlaneseq
    %v1401 = vshrl.u32 %v1400, 7
    %v1402 = vsub.s32 %v1399, %v1401
    %v1403 = vrot.slane %v1363, %v1402
    %v1404 = vcombine.low %v1396, %v1403
    %v1406 = vunpack.c.l.s4 1966171168
    %v1407 = vunpack.c.0.s8 %v1406
    %v1408 = vlaneseq
    %v1409 = vshrl.u32 %v1408, 7
    %v1410 = vsub.s32 %v1407, %v1409
    %v1411 = vrot.slane %v1404, %v1410
    %1414 = vst.msk [vmem:[%s14] sm:$0x7] %vm1114, %v1388
    %1415 = vst.msk [vmem:[%s14 + $0x4] sm:$0x7] %vm1114, %v1411
    // Predicated region
    $region54: #{tpu_custom_call.1} parent=1 // pred_check
      _
    $region55: #{tpu_custom_call.1} parent=1 // pred_check_branch
      %1417 = sbr.rel (0) target = $region57
    $region56: #{tpu_custom_call.1} parent=1 // pred_region
      _
    $region57: #{tpu_custom_call.1} parent=1 // pred_fallthru
      _
    // Predicated region
    $region58: #{tpu_custom_call.1} parent=1 // pred_check
      _
    $region59: #{tpu_custom_call.1} parent=1 // pred_check_branch
      %1419 = sbr.rel (0) target = $region61
    $region60: #{tpu_custom_call.1} parent=1 // pred_region
      _
    $region61: #{tpu_custom_call.1} parent=1 // pred_fallthru
      _
    // Predicated region
    $region62: #{tpu_custom_call.1} parent=1 // pred_check
      _
    $region63: #{tpu_custom_call.1} parent=1 // pred_check_branch
      %1421 = sbr.rel (0) target = $region65
    $region64: #{tpu_custom_call.1} parent=1 // pred_region
      %s1423 = ssub.s32 128, 128
      %1424 = vsyncadd [#allocation3], %s1423
      %s1425 = sshll.u32 [#allocation2], 4
      %s1426 = int_to_ptr.vmem [resolvable:$true] %s1425
      %1431 = dma.vmem_to_hbm [thread:$0]  %s1426, 128, %s15, [#allocation3], 64, 64, 4
    $region65: #{tpu_custom_call.1} parent=1 // pred_fallthru
      _
    // Predicated region
    $region66: #{tpu_custom_call.1} parent=1 // pred_check
      _
    $region67: #{tpu_custom_call.1} parent=1 // pred_check_branch
      %1433 = sbr.rel (0) target = $region69
    $region68: #{tpu_custom_call.1} parent=1 // pred_region
      %s1435 = ssub.s32 128, 128
      %1436 = vsyncadd [#allocation5], %s1435
      %s1437 = sshll.u32 [#allocation4], 4
      %s1438 = int_to_ptr.vmem [resolvable:$true] %s1437
      %1443 = dma.vmem_to_hbm [thread:$0]  %s1438, 128, %s16, [#allocation5], 64, 64, 4
    $region69: #{tpu_custom_call.1} parent=1 // pred_fallthru
      _
    // Predicated region
    $region70: #{tpu_custom_call.1} parent=1 // pred_check
      _
    $region71: #{tpu_custom_call.1} parent=1 // pred_check_branch
      %1445 = sbr.rel (0) target = $region73
    $region72: #{tpu_custom_call.1} parent=1 // pred_region
      _
    $region73: #{tpu_custom_call.1} parent=1 // pred_fallthru
      _
    // Predicated region
    $region74: #{tpu_custom_call.1} parent=1 // pred_check
      _
    $region75: #{tpu_custom_call.1} parent=1 // pred_check_branch
      %1447 = sbr.rel (0) target = $region77
    $region76: #{tpu_custom_call.1} parent=1 // pred_region
      _
    $region77: #{tpu_custom_call.1} parent=1 // pred_fallthru
      _
    // Predicated region
    $region78: #{tpu_custom_call.1} parent=1 // pred_check
      _
    $region79: #{tpu_custom_call.1} parent=1 // pred_check_branch
      %1449 = sbr.rel (0) target = $region81
    $region80: #{tpu_custom_call.1} parent=1 // pred_region
      %1450 = dma.done [#allocation3], 128
    $region81: #{tpu_custom_call.1} parent=1 // pred_fallthru
      _
    // Predicated region
    $region82: #{tpu_custom_call.1} parent=1 // pred_check
      _
    $region83: #{tpu_custom_call.1} parent=1 // pred_check_branch
      %1452 = sbr.rel (0) target = $region85
    $region84: #{tpu_custom_call.1} parent=1 // pred_region
      %1453 = dma.done [#allocation5], 128
    $region85: #{tpu_custom_call.1} parent=1 // pred_fallthru
      _
    %1454 = vsyncpa [#allocation3], 1
    %1455 = vsyncpa [#allocation5], 1

</llo_original>
